<compile_context>
chip_gen: v7x
topology: tpu7x:2x2x1
jax: 0.10.0
libtpu: 0.0.40
codegen_flags: <defaults>
</compile_context>

<pallas_src>
import functools

import jax
import jax.numpy as jnp
from jax.experimental import pallas as pl
from jax.experimental.pallas import tpu as pltpu

# --- sizes (torch.cat(dim=0) in the reference requires theorem dim == entity dim) ---
ENTITY_DIM = 32
THEOREM_DIM = 32
MAX_OPERANDS = 5
INPUT_SIZE = THEOREM_DIM + (1 + MAX_OPERANDS) * ENTITY_DIM      # 224
CTX_DIM = INPUT_SIZE - ENTITY_DIM                               # 192 (theorem + taken)

# nn.Sequential layer widths exactly as in __init__
LAYER_DIMS = [
    INPUT_SIZE,                       # 224
    2 * INPUT_SIZE,                   # 448
    int(1.4 * INPUT_SIZE),            # 313
    INPUT_SIZE,                       # 224
    int(0.5 * INPUT_SIZE),            # 112
    int(1.0 / 16 * INPUT_SIZE),       # 14
    1,
]
NUM_LAYERS = len(LAYER_DIMS) - 1      # 6

X_PAD = 128                           # per-row entity input, zero padded 32 -> 128 lanes
HIDDEN_PAD = [448, 384, 256, 128, 128]  # padded out-widths of kernel layers 0..4
BIAS_PAD = 512                        # lane width of the packed bias/const buffer
TILE_CAP = 128                        # max batch tile; 128 keeps >=2 grid steps for B>128 (v7x)


def _round_up(n, m):
    return ((n + m - 1) // m) * m


def q_mlp_kernel(x_ref, ctx_ref, w0, w1, w2, w3, w4, bias_ref, o_ref):
    """x_ref:    (tile, 128) bf16 -- candidate entity embedding, zero padded 32 -> 128
       ctx_ref:  (1, 448)    f32  -- hoisted context row: ctx @ W0[:192,:] + b0
       w0:       (128, 448)  bf16 -- entity rows of W0 (zero padded)
       w1..w4:   bf16 padded hidden weights (448x384, 384x256, 256x128, 128x128)
       bias_ref: (8, 512)    f32  -- rows 0..3 = b1..b4, row 4 = W5^T (14 -> 128), row 5 col 0 = b5
       o_ref:    (tile, 1)   f32  -- Q values
    """
    # layer 0: entity part on the MXU + precomputed context contribution (includes b0), ReLU
    h = jnp.dot(x_ref[...], w0[...], preferred_element_type=jnp.float32)
    h = jnp.maximum(h + ctx_ref[...], 0.0)                          # (tile, 448) f32

    # layers 1..4: Linear + ReLU (bf16 weights, f32 accumulation)
    for i, w_ref in enumerate((w1, w2, w3, w4)):
        b = bias_ref[i:i + 1, 0:w_ref.shape[1]]                     # (1, width) f32, static slice
        h = jnp.dot(h.astype(jnp.bfloat16), w_ref[...],
                    preferred_element_type=jnp.float32) + b
        h = jnp.maximum(h, 0.0)

    # layer 5 (14 -> 1, no ReLU): f32 VPU multiply + lane reduction -> lane-narrow store
    w5_row = bias_ref[4:5, 0:128]                                   # (1, 128) f32
    b5 = bias_ref[5:6, 0:1]                                         # (1, 1)   f32
    o_ref[...] = jnp.sum(h * w5_row, axis=-1, keepdims=True) + b5


def _act_spec(tile, num_tiles):
    idx = lambda b: (b, 0)
    if num_tiles >= 4:
        # triple-buffer the only per-step-varying input on long grids (v6e feedback);
        # degrade gracefully if this jax build lacks the pipeline_mode kwarg.
        try:
            return pl.BlockSpec((tile, X_PAD), idx, pipeline_mode=pl.Buffered(3))
        except TypeError:
            pass
    return pl.BlockSpec((tile, X_PAD), idx)


def q_layers_pallas(x, ctx_bias, weights, bias_buf, *, tile):
    """x: (B_pad, 128) bf16, B_pad a multiple of `tile`. Returns (B_pad, 1) f32 Q values."""
    bp = x.shape[0]
    num_tiles = bp // tile
    # constant index_map -> these stay VMEM-resident across grid steps
    const_specs = [pl.BlockSpec(a.shape, lambda b: (0, 0))
                   for a in (ctx_bias, *weights, bias_buf)]
    grid_spec = pltpu.PrefetchScalarGridSpec(
        num_scalar_prefetch=0,
        grid=(num_tiles,),
        in_specs=[_act_spec(tile, num_tiles)] + const_specs,
        out_specs=pl.BlockSpec((tile, 1), lambda b: (b, 0)),
    )
    return pl.pallas_call(
        q_mlp_kernel,
        out_shape=jax.ShapeDtypeStruct((bp, 1), jnp.float32),
        grid_spec=grid_spec,
        compiler_params=pltpu.CompilerParams(
            dimension_semantics=("parallel",)),      # shards grid steps across v7x's 2 TCs
    )(x, ctx_bias, *weights, bias_buf)


def init_q_params(key):
    """torch.nn.Linear default init U(-1/sqrt(fan_in), +1/sqrt(fan_in)).
    Returns (params dict for the kernel/wrapper, unpadded f32 weights, unpadded f32 biases)."""
    ws_f32, bs_f32 = [], []
    for i in range(NUM_LAYERS):
        fan_in, fan_out = LAYER_DIMS[i], LAYER_DIMS[i + 1]
        key, kw, kb = jax.random.split(key, 3)
        bound = 1.0 / (fan_in ** 0.5)
        ws_f32.append(jax.random.uniform(kw, (fan_in, fan_out), jnp.float32, -bound, bound))
        bs_f32.append(jax.random.uniform(kb, (fan_out,), jnp.float32, -bound, bound))

    # layer 0 split: context rows (theorem + taken, 192) used in the wrapper,
    # entity rows (32) zero padded to 128 used in the kernel.
    w0 = ws_f32[0]                                                  # (224, 448)
    w0_ctx = w0[:CTX_DIM, :].astype(jnp.bfloat16)                   # (192, 448)
    w0_ent = jnp.zeros((X_PAD, HIDDEN_PAD[0]), jnp.float32)
    w0_ent = w0_ent.at[:ENTITY_DIM, :].set(w0[CTX_DIM:, :]).astype(jnp.bfloat16)
    b0 = bs_f32[0][None, :]                                         # (1, 448) f32

    # hidden layers 1..4, zero padded to lane-friendly widths, bf16 in HBM
    w_kern = [w0_ent]
    for i in range(1, 5):
        wp = jnp.zeros((HIDDEN_PAD[i - 1], HIDDEN_PAD[i]), jnp.float32)
        wp = wp.at[:LAYER_DIMS[i], :LAYER_DIMS[i + 1]].set(ws_f32[i])
        w_kern.append(wp.astype(jnp.bfloat16))

    # packed f32 constants: rows 0..3 = b1..b4, row 4 = W5^T (padded 14 -> 128), row 5 col 0 = b5
    bias_buf = jnp.zeros((8, BIAS_PAD), jnp.float32)
    for i in range(1, 5):
        bias_buf = bias_buf.at[i - 1, :LAYER_DIMS[i + 1]].set(bs_f32[i])
    bias_buf = bias_buf.at[4, :LAYER_DIMS[5]].set(ws_f32[5][:, 0])
    bias_buf = bias_buf.at[5, 0].set(bs_f32[5][0])

    params = {"w0_ctx": w0_ctx, "b0": b0, "w_kern": w_kern, "bias": bias_buf}
    return params, ws_f32, bs_f32


@functools.partial(jax.jit, static_argnames=("tile_cap",))
def agnostic_q_forward_batch(theorem_emb, entities_taken_flat, entity_embs, params,
                             *, tile_cap=TILE_CAP):
    """Batched forward: scores B candidate entities against one (theorem, entities_taken)
    context (the access pattern of _max_action / _choose_next_entity).
      theorem_emb:         (1, 32)
      entities_taken_flat: (1, MAX_OPERANDS*32), already zero-padded
      entity_embs:         (B, 32)
    Returns (B, 1) f32 Q values."""
    B = entity_embs.shape[0]
    ctx = jnp.concatenate([theorem_emb, entities_taken_flat], axis=1)            # (1, 192)
    # hoist the shared context through layer 0 once (bf16 weights, f32 accumulation)
    ctx_bias = jnp.dot(ctx.astype(jnp.bfloat16), params["w0_ctx"],
                       preferred_element_type=jnp.float32) + params["b0"]        # (1, 448)

    tile = min(tile_cap, _round_up(B, 16))       # multiple of 16 (bf16 sublane packing)
    bp = _round_up(B, tile)
    x = jnp.pad(entity_embs, ((0, bp - B), (0, X_PAD - ENTITY_DIM))).astype(jnp.bfloat16)
    q = q_layers_pallas(x, ctx_bias, params["w_kern"], params["bias"], tile=tile)
    # padded rows carry bias-propagated garbage Q values by construction -> always slice [:B]
    return q[:B]


def agnostic_q_forward(theorem_emb, entities_taken_embs, entity_emb, params):
    """Single-evaluation forward matching the original module interface:
    cat([theorem] + entities_taken (zero-padded to MAX_OPERANDS) + [entity]).view(1,-1) -> Q MLP."""
    assert len(entities_taken_embs) <= MAX_OPERANDS
    # TODO(synk): the original also asserts len(entities_taken) < theorem.input_no (needs the theorem object).
    pads = [jnp.zeros((1, ENTITY_DIM), jnp.float32)] * (MAX_OPERANDS - len(entities_taken_embs))
    taken_flat = jnp.concatenate(list(entities_taken_embs) + pads, axis=1)       # (1, 160)
    return agnostic_q_forward_batch(theorem_emb, taken_flat, entity_emb, params)


def _reference_checks(theorem_emb, taken_flat, entity_embs, q, params, ws_f32, bs_f32):
    """Compare kernel output against (a) a numerics-matched bf16/f32 reference and
    (b) the full-f32 original-module MLP."""
    B = entity_embs.shape[0]
    ctx = jnp.concatenate([theorem_emb, taken_flat], axis=1)                     # (1, 192)

    # (a) matched reference (same padded bf16 weights / f32 accumulation as the kernel)
    ent_pad = jnp.pad(entity_embs, ((0, 0), (0, X_PAD - ENTITY_DIM))).astype(jnp.bfloat16)
    h = (jnp.dot(ctx.astype(jnp.bfloat16), params["w0_ctx"], preferred_element_type=jnp.float32)
         + params["b0"]
         + jnp.dot(ent_pad, params["w_kern"][0], preferred_element_type=jnp.float32))
    h = jnp.maximum(h, 0.0)
    for i, w in enumerate(params["w_kern"][1:]):
        h = jnp.dot(h.astype(jnp.bfloat16), w, preferred_element_type=jnp.float32) \
            + params["bias"][i, :w.shape[1]]
        h = jnp.maximum(h, 0.0)
    q_matched = jnp.sum(h * params["bias"][4:5, :128], axis=-1, keepdims=True) + params["bias"][5, 0]
    assert jnp.allclose(q, q_matched, atol=2e-3, rtol=2e-3)

    # (b) full-f32 reference of the original module MLP (loose tol: weights stored as bf16)
    x = jnp.concatenate([jnp.broadcast_to(ctx, (B, CTX_DIM)), entity_embs], axis=1)   # (B, 224)
    hf = x
    for i, (w, b) in enumerate(zip(ws_f32, bs_f32)):
        hf = hf @ w + b
        if i < NUM_LAYERS - 1:
            hf = jnp.maximum(hf, 0.0)
    assert jnp.allclose(q, hf, atol=5e-2, rtol=5e-2)


if __name__ == "__main__":
    key = jax.random.PRNGKey(0)
    key, k_th, k_tk, k_ent, k_big, k_par = jax.random.split(key, 6)

    # synthetic "encoded" inputs (in place of encoder.encode_theorem / encode_entity)
    theorem_emb = jax.random.normal(k_th, (1, THEOREM_DIM), jnp.float32)
    n_taken = 2
    taken = [jax.random.normal(jax.random.fold_in(k_tk, i), (1, ENTITY_DIM), jnp.float32)
             for i in range(n_taken)]
    taken_flat = jnp.concatenate(
        taken + [jnp.zeros((1, ENTITY_DIM), jnp.float32)] * (MAX_OPERANDS - n_taken), axis=1)

    params, ws_f32, bs_f32 = init_q_params(k_par)

    # --- small candidate set (the realistic _max_action / _choose_next_entity shape) ---
    NUM_CANDIDATES = 8
    entity_embs = jax.random.normal(k_ent, (NUM_CANDIDATES, ENTITY_DIM), jnp.float32)
    q = agnostic_q_forward_batch(theorem_emb, taken_flat, entity_embs, params)
    q = jax.block_until_ready(q)
    assert q.shape == (NUM_CANDIDATES, 1) and q.dtype == jnp.float32
    _reference_checks(theorem_emb, taken_flat, entity_embs, q, params, ws_f32, bs_f32)

    # --- original single-(theorem, entities_taken, entity) interface (B=1 path) ---
    q_single = agnostic_q_forward(theorem_emb, taken, entity_embs[:1], params)
    q_single = jax.block_until_ready(q_single)
    assert q_single.shape == (1, 1)
    assert jnp.allclose(q_single, q[:1], atol=1e-3, rtol=1e-3)

    # --- larger batch: exercises the multi-tile grid (both v7x TCs) + Buffered(3) path ---
    B_BIG = 600
    entity_embs_big = jax.random.normal(k_big, (B_BIG, ENTITY_DIM), jnp.float32)
    q_big = agnostic_q_forward_batch(theorem_emb, taken_flat, entity_embs_big, params)
    q_big = jax.block_until_ready(q_big)
    assert q_big.shape == (B_BIG, 1)
    _reference_checks(theorem_emb, taken_flat, entity_embs_big, q_big, params, ws_f32, bs_f32)

    print("KERNEL_OK")
</pallas_src>

<mosaic_0001>
module attributes {stable_mosaic.version = 11 : i64} {
  func.func @q_mlp_kernel(%arg0: i32, %arg1: memref<16x128xbf16, #tpu.memory_space<vmem>>, %arg2: memref<1x448xf32, #tpu.memory_space<vmem>>, %arg3: memref<128x448xbf16, #tpu.memory_space<vmem>>, %arg4: memref<448x384xbf16, #tpu.memory_space<vmem>>, %arg5: memref<384x256xbf16, #tpu.memory_space<vmem>>, %arg6: memref<256x128xbf16, #tpu.memory_space<vmem>>, %arg7: memref<128x128xbf16, #tpu.memory_space<vmem>>, %arg8: memref<8x512xf32, #tpu.memory_space<vmem>>, %arg9: memref<16x1xf32, #tpu.memory_space<vmem>>) attributes {dimension_semantics = [#tpu.dimension_semantics<parallel>], iteration_bounds = array<i64: 1>, scalar_prefetch = 0 : i64, scratch_operands = 0 : i64, tpu.core_type = #tpu.core_type<tc>, window_params = [{transform_indices = @transform_0, window_bounds = array<i64: 16, 128>}, {pipeline_mode = #tpu.pipeline_mode<synchronous>, transform_indices = @transform_1, window_bounds = array<i64: 1, 448>}, {pipeline_mode = #tpu.pipeline_mode<synchronous>, transform_indices = @transform_2, window_bounds = array<i64: 128, 448>}, {pipeline_mode = #tpu.pipeline_mode<synchronous>, transform_indices = @transform_3, window_bounds = array<i64: 448, 384>}, {pipeline_mode = #tpu.pipeline_mode<synchronous>, transform_indices = @transform_4, window_bounds = array<i64: 384, 256>}, {pipeline_mode = #tpu.pipeline_mode<synchronous>, transform_indices = @transform_5, window_bounds = array<i64: 256, 128>}, {pipeline_mode = #tpu.pipeline_mode<synchronous>, transform_indices = @transform_6, window_bounds = array<i64: 128, 128>}, {pipeline_mode = #tpu.pipeline_mode<synchronous>, transform_indices = @transform_7, window_bounds = array<i64: 8, 512>}, {transform_indices = @transform_8, window_bounds = array<i64: 16, 1>}]} {
    %c0 = arith.constant 0 : index
    %c0_0 = arith.constant 0 : index
    %0 = vector.load %arg1[%c0, %c0_0] : memref<16x128xbf16, #tpu.memory_space<vmem>>, vector<16x128xbf16>
    %c0_1 = arith.constant 0 : index
    %c0_2 = arith.constant 0 : index
    %1 = vector.load %arg3[%c0_1, %c0_2] : memref<128x448xbf16, #tpu.memory_space<vmem>>, vector<128x448xbf16>
    %cst = arith.constant dense<0.000000e+00> : vector<16x448xf32>
    %2 = tpu.matmul %0, %1, %cst {dimension_numbers = #tpu.dot_dimension_numbers<[1], [0], [0], [1], [0, 0, 1, 1], [], []>} : vector<16x128xbf16>, vector<128x448xbf16>, vector<16x448xf32> -> vector<16x448xf32>
    %c0_3 = arith.constant 0 : index
    %c0_4 = arith.constant 0 : index
    %3 = vector.load %arg2[%c0_3, %c0_4] : memref<1x448xf32, #tpu.memory_space<vmem>>, vector<1x448xf32>
    %4 = vector.broadcast %3 : vector<1x448xf32> to vector<16x448xf32>
    %5 = arith.addf %2, %4 : vector<16x448xf32>
    %cst_5 = arith.constant 0.000000e+00 : f32
    %6 = vector.broadcast %cst_5 : f32 to vector<16x448xf32>
    %7 = arith.maximumf %5, %6 : vector<16x448xf32>
    %c0_6 = arith.constant 0 : index
    %c0_7 = arith.constant 0 : index
    %8 = vector.load %arg8[%c0_6, %c0_7] : memref<8x512xf32, #tpu.memory_space<vmem>>, vector<1x384xf32>
    %9 = arith.truncf %7 : vector<16x448xf32> to vector<16x448xbf16>
    %c0_8 = arith.constant 0 : index
    %c0_9 = arith.constant 0 : index
    %10 = vector.load %arg4[%c0_8, %c0_9] : memref<448x384xbf16, #tpu.memory_space<vmem>>, vector<448x384xbf16>
    %cst_10 = arith.constant dense<0.000000e+00> : vector<16x384xf32>
    %11 = tpu.matmul %9, %10, %cst_10 {dimension_numbers = #tpu.dot_dimension_numbers<[1], [0], [0], [1], [0, 0, 1, 1], [], []>} : vector<16x448xbf16>, vector<448x384xbf16>, vector<16x384xf32> -> vector<16x384xf32>
    %12 = vector.broadcast %8 : vector<1x384xf32> to vector<16x384xf32>
    %13 = arith.addf %11, %12 : vector<16x384xf32>
    %cst_11 = arith.constant 0.000000e+00 : f32
    %14 = vector.broadcast %cst_11 : f32 to vector<16x384xf32>
    %15 = arith.maximumf %13, %14 : vector<16x384xf32>
    %c1 = arith.constant 1 : index
    %c0_12 = arith.constant 0 : index
    %16 = vector.load %arg8[%c1, %c0_12] : memref<8x512xf32, #tpu.memory_space<vmem>>, vector<1x256xf32>
    %17 = arith.truncf %15 : vector<16x384xf32> to vector<16x384xbf16>
    %c0_13 = arith.constant 0 : index
    %c0_14 = arith.constant 0 : index
    %18 = vector.load %arg5[%c0_13, %c0_14] : memref<384x256xbf16, #tpu.memory_space<vmem>>, vector<384x256xbf16>
    %cst_15 = arith.constant dense<0.000000e+00> : vector<16x256xf32>
    %19 = tpu.matmul %17, %18, %cst_15 {dimension_numbers = #tpu.dot_dimension_numbers<[1], [0], [0], [1], [0, 0, 1, 1], [], []>} : vector<16x384xbf16>, vector<384x256xbf16>, vector<16x256xf32> -> vector<16x256xf32>
    %20 = vector.broadcast %16 : vector<1x256xf32> to vector<16x256xf32>
    %21 = arith.addf %19, %20 : vector<16x256xf32>
    %cst_16 = arith.constant 0.000000e+00 : f32
    %22 = vector.broadcast %cst_16 : f32 to vector<16x256xf32>
    %23 = arith.maximumf %21, %22 : vector<16x256xf32>
    %c2 = arith.constant 2 : index
    %c0_17 = arith.constant 0 : index
    %24 = vector.load %arg8[%c2, %c0_17] : memref<8x512xf32, #tpu.memory_space<vmem>>, vector<1x128xf32>
    %25 = arith.truncf %23 : vector<16x256xf32> to vector<16x256xbf16>
    %c0_18 = arith.constant 0 : index
    %c0_19 = arith.constant 0 : index
    %26 = vector.load %arg6[%c0_18, %c0_19] : memref<256x128xbf16, #tpu.memory_space<vmem>>, vector<256x128xbf16>
    %cst_20 = arith.constant dense<0.000000e+00> : vector<16x128xf32>
    %27 = tpu.matmul %25, %26, %cst_20 {dimension_numbers = #tpu.dot_dimension_numbers<[1], [0], [0], [1], [0, 0, 1, 1], [], []>} : vector<16x256xbf16>, vector<256x128xbf16>, vector<16x128xf32> -> vector<16x128xf32>
    %28 = vector.broadcast %24 : vector<1x128xf32> to vector<16x128xf32>
    %29 = arith.addf %27, %28 : vector<16x128xf32>
    %cst_21 = arith.constant 0.000000e+00 : f32
    %30 = vector.broadcast %cst_21 : f32 to vector<16x128xf32>
    %31 = arith.maximumf %29, %30 : vector<16x128xf32>
    %c3 = arith.constant 3 : index
    %c0_22 = arith.constant 0 : index
    %32 = vector.load %arg8[%c3, %c0_22] : memref<8x512xf32, #tpu.memory_space<vmem>>, vector<1x128xf32>
    %33 = arith.truncf %31 : vector<16x128xf32> to vector<16x128xbf16>
    %c0_23 = arith.constant 0 : index
    %c0_24 = arith.constant 0 : index
    %34 = vector.load %arg7[%c0_23, %c0_24] : memref<128x128xbf16, #tpu.memory_space<vmem>>, vector<128x128xbf16>
    %cst_25 = arith.constant dense<0.000000e+00> : vector<16x128xf32>
    %35 = tpu.matmul %33, %34, %cst_25 {dimension_numbers = #tpu.dot_dimension_numbers<[1], [0], [0], [1], [0, 0, 1, 1], [], []>} : vector<16x128xbf16>, vector<128x128xbf16>, vector<16x128xf32> -> vector<16x128xf32>
    %36 = vector.broadcast %32 : vector<1x128xf32> to vector<16x128xf32>
    %37 = arith.addf %35, %36 : vector<16x128xf32>
    %cst_26 = arith.constant 0.000000e+00 : f32
    %38 = vector.broadcast %cst_26 : f32 to vector<16x128xf32>
    %39 = arith.maximumf %37, %38 : vector<16x128xf32>
    %c4 = arith.constant 4 : index
    %c0_27 = arith.constant 0 : index
    %40 = vector.load %arg8[%c4, %c0_27] : memref<8x512xf32, #tpu.memory_space<vmem>>, vector<1x128xf32>
    %c5 = arith.constant 5 : index
    %c0_28 = arith.constant 0 : index
    %41 = vector.load %arg8[%c5, %c0_28] : memref<8x512xf32, #tpu.memory_space<vmem>>, vector<1x1xf32>
    %42 = vector.broadcast %40 : vector<1x128xf32> to vector<16x128xf32>
    %43 = arith.mulf %39, %42 : vector<16x128xf32>
    %cst_29 = arith.constant dense<0.000000e+00> : vector<16xf32>
    %44 = vector.multi_reduction <add>, %43, %cst_29 [1] : vector<16x128xf32> to vector<16xf32>
    %45 = vector.shape_cast %44 : vector<16xf32> to vector<16x1xf32>
    %46 = vector.broadcast %41 : vector<1x1xf32> to vector<16x1xf32>
    %47 = arith.addf %45, %46 : vector<16x1xf32>
    %c0_30 = arith.constant 0 : index
    %c0_31 = arith.constant 0 : index
    %48 = vector.load %arg9[%c0_30, %c0_31] : memref<16x1xf32, #tpu.memory_space<vmem>>, vector<16x1xf32>
    tpu.vector_store %arg9[%c0_30, %c0_31], %47 {strides = array<i32>} : memref<16x1xf32, #tpu.memory_space<vmem>>, vector<16x1xf32>,
    return
  }
  func.func @transform_0(%arg0: i32) -> (i32, i32) {
    %c0_i32 = arith.constant 0 : i32
    %c0_i32_0 = arith.constant 0 : i32
    return %arg0, %c0_i32 : i32, i32
  }
  func.func @transform_1(%arg0: i32) -> (i32, i32) {
    %c0_i32 = arith.constant 0 : i32
    %c0_i32_0 = arith.constant 0 : i32
    %c0_i32_1 = arith.constant 0 : i32
    return %c0_i32, %c0_i32_0 : i32, i32
  }
  func.func @transform_2(%arg0: i32) -> (i32, i32) {
    %c0_i32 = arith.constant 0 : i32
    %c0_i32_0 = arith.constant 0 : i32
    %c0_i32_1 = arith.constant 0 : i32
    return %c0_i32, %c0_i32_0 : i32, i32
  }
  func.func @transform_3(%arg0: i32) -> (i32, i32) {
    %c0_i32 = arith.constant 0 : i32
    %c0_i32_0 = arith.constant 0 : i32
    %c0_i32_1 = arith.constant 0 : i32
    return %c0_i32, %c0_i32_0 : i32, i32
  }
  func.func @transform_4(%arg0: i32) -> (i32, i32) {
    %c0_i32 = arith.constant 0 : i32
    %c0_i32_0 = arith.constant 0 : i32
    %c0_i32_1 = arith.constant 0 : i32
    return %c0_i32, %c0_i32_0 : i32, i32
  }
  func.func @transform_5(%arg0: i32) -> (i32, i32) {
    %c0_i32 = arith.constant 0 : i32
    %c0_i32_0 = arith.constant 0 : i32
    %c0_i32_1 = arith.constant 0 : i32
    return %c0_i32, %c0_i32_0 : i32, i32
  }
  func.func @transform_6(%arg0: i32) -> (i32, i32) {
    %c0_i32 = arith.constant 0 : i32
    %c0_i32_0 = arith.constant 0 : i32
    %c0_i32_1 = arith.constant 0 : i32
    return %c0_i32, %c0_i32_0 : i32, i32
  }
  func.func @transform_7(%arg0: i32) -> (i32, i32) {
    %c0_i32 = arith.constant 0 : i32
    %c0_i32_0 = arith.constant 0 : i32
    %c0_i32_1 = arith.constant 0 : i32
    return %c0_i32, %c0_i32_0 : i32, i32
  }
  func.func @transform_8(%arg0: i32) -> (i32, i32) {
    %c0_i32 = arith.constant 0 : i32
    %c0_i32_0 = arith.constant 0 : i32
    return %arg0, %c0_i32 : i32, i32
  }
}

</mosaic_0001>

<llo_original>
// kernel: agnostic_q_forward_batch.1
$region0: #{agnostic_q_forward_batch.1}
  #allocation0 [shape = 'u32[]', space=smem, size = 0x4, offset = 0x4, fixed_abs, tag = 'smem constant byte address 0x4 - core index']
  #allocation1 [shape = 'u32[144,128]{1,0:T(1,128)}', space=vmem, size = 0x12000, scoped, tag = 'internal scratch']
  %s0 = inlined_call_operand.vmem [shape: bf16[16,128], index: 0, kind: input, shape index: {}]
  %s1 = inlined_call_operand.vmem [shape: f32[1,448], index: 1, kind: input, shape index: {}]
  %s2 = inlined_call_operand.vmem [shape: bf16[128,448], index: 2, kind: input, shape index: {}]
  %s3 = inlined_call_operand.vmem [shape: bf16[448,384], index: 3, kind: input, shape index: {}]
  %s4 = inlined_call_operand.hbm [shape: bf16[384,256], index: 4, kind: input, shape index: {}]
  %s5 = inlined_call_operand.vmem [shape: bf16[256,128], index: 5, kind: input, shape index: {}]
  %s6 = inlined_call_operand.vmem [shape: bf16[128,128], index: 6, kind: input, shape index: {}]
  %s7 = inlined_call_operand.vmem [shape: f32[8,512], index: 7, kind: input, shape index: {}]
  %s8 = inlined_call_operand.vmem [shape: f32[16,1], index: 8, kind: output, shape index: {}]
  %s9 = sld [smem:[#allocation0]]
  $region46: #{agnostic_q_forward_batch.1} parent=0
    _
  %s11 = ssub.s32 1, %s9
  %s12 = scalar_select 0, %s11, %s9
  $region1: #{agnostic_q_forward_batch.1} parent=0
    #allocation2 [shape = 'u8[196608]{0}', space=vmem, size = 0x30000, scoped, tag = 'input window, operand 4, single buffered']
    #allocation3 [shape = 's32[1]{0}', space=sflag, size = 0x4, scoped, tag = 'scoped memory for agnostic_q_forward_batch.1']
    %13 = vsyncpa [#allocation3], 0
    // Predicated region
    $region2: #{agnostic_q_forward_batch.1} parent=1 // pred_check
      _
    $region3: #{agnostic_q_forward_batch.1} parent=1 // pred_check_branch
      %15 = sbr.rel (0) target = $region5
    $region4: #{agnostic_q_forward_batch.1} parent=1 // pred_region
      _
    $region5: #{agnostic_q_forward_batch.1} parent=1 // pred_fallthru
      _
    // Predicated region
    $region6: #{agnostic_q_forward_batch.1} parent=1 // pred_check
      _
    $region7: #{agnostic_q_forward_batch.1} parent=1 // pred_check_branch
      %17 = sbr.rel (0) target = $region9
    $region8: #{agnostic_q_forward_batch.1} parent=1 // pred_region
      _
    $region9: #{agnostic_q_forward_batch.1} parent=1 // pred_fallthru
      _
    // Predicated region
    $region10: #{agnostic_q_forward_batch.1} parent=1 // pred_check
      _
    $region11: #{agnostic_q_forward_batch.1} parent=1 // pred_check_branch
      %19 = sbr.rel (0) target = $region13
    $region12: #{agnostic_q_forward_batch.1} parent=1 // pred_region
      _
    $region13: #{agnostic_q_forward_batch.1} parent=1 // pred_fallthru
      _
    // Predicated region
    $region14: #{agnostic_q_forward_batch.1} parent=1 // pred_check
      _
    $region15: #{agnostic_q_forward_batch.1} parent=1 // pred_check_branch
      %21 = sbr.rel (0) target = $region17
    $region16: #{agnostic_q_forward_batch.1} parent=1 // pred_region
      _
    $region17: #{agnostic_q_forward_batch.1} parent=1 // pred_fallthru
      _
    // Predicated region
    $region18: #{agnostic_q_forward_batch.1} parent=1 // pred_check
      _
    $region19: #{agnostic_q_forward_batch.1} parent=1 // pred_check_branch
      %23 = sbr.rel (0) target = $region21
    $region20: #{agnostic_q_forward_batch.1} parent=1 // pred_region
      %s25 = ssub.s32 6144, 6144
      %26 = vsyncadd [#allocation3], %s25
      %s27 = sshll.u32 [#allocation2], 4
      %s28 = int_to_ptr.vmem [resolvable:$true] %s27
      %33 = dma.hbm_to_vmem [thread:$0]  %s4, 6144, %s28, [#allocation3], 128, 128, 8
    $region21: #{agnostic_q_forward_batch.1} parent=1 // pred_fallthru
      _
    // Predicated region
    $region22: #{agnostic_q_forward_batch.1} parent=1 // pred_check
      _
    $region23: #{agnostic_q_forward_batch.1} parent=1 // pred_check_branch
      %35 = sbr.rel (0) target = $region25
    $region24: #{agnostic_q_forward_batch.1} parent=1 // pred_region
      _
    $region25: #{agnostic_q_forward_batch.1} parent=1 // pred_fallthru
      _
    // Predicated region
    $region26: #{agnostic_q_forward_batch.1} parent=1 // pred_check
      _
    $region27: #{agnostic_q_forward_batch.1} parent=1 // pred_check_branch
      %37 = sbr.rel (0) target = $region29
    $region28: #{agnostic_q_forward_batch.1} parent=1 // pred_region
      _
    $region29: #{agnostic_q_forward_batch.1} parent=1 // pred_fallthru
      _
    // Predicated region
    $region30: #{agnostic_q_forward_batch.1} parent=1 // pred_check
      _
    $region31: #{agnostic_q_forward_batch.1} parent=1 // pred_check_branch
      %39 = sbr.rel (0) target = $region33
    $region32: #{agnostic_q_forward_batch.1} parent=1 // pred_region
      _
    $region33: #{agnostic_q_forward_batch.1} parent=1 // pred_fallthru
      _
    // Predicated region
    $region34: #{agnostic_q_forward_batch.1} parent=1 // pred_check
      _
    $region35: #{agnostic_q_forward_batch.1} parent=1 // pred_check_branch
      %41 = sbr.rel (0) target = $region37
    $region36: #{agnostic_q_forward_batch.1} parent=1 // pred_region
      %42 = dma.done [#allocation3], 6144
    $region37: #{agnostic_q_forward_batch.1} parent=1 // pred_fallthru
      _
    %v44 = vld [vmem:[%s0] sm:$0xf]
    %v45 = vld [vmem:[%s0 + $0x4] sm:$0xf]
    %v46 = vld [vmem:[%s2] sm:$0xff]
    %v47 = vld [vmem:[%s2 + $0x8] sm:$0xff]
    %v48 = vld [vmem:[%s2 + $0x10] sm:$0xff]
    %v49 = vld [vmem:[%s2 + $0x18] sm:$0xff]
    %v50 = vld [vmem:[%s2 + $0x20] sm:$0xff]
    %v51 = vld [vmem:[%s2 + $0x28] sm:$0xff]
    %v52 = vld [vmem:[%s2 + $0x30] sm:$0xff]
    %v53 = vld [vmem:[%s2 + $0x38] sm:$0xff]
    %v54 = vld [vmem:[%s2 + $0x40] sm:$0xff]
    %v55 = vld [vmem:[%s2 + $0x48] sm:$0xff]
    %v56 = vld [vmem:[%s2 + $0x50] sm:$0xff]
    %v57 = vld [vmem:[%s2 + $0x58] sm:$0xff]
    %v58 = vld [vmem:[%s2 + $0x60] sm:$0xff]
    %v59 = vld [vmem:[%s2 + $0x68] sm:$0xff]
    %v60 = vld [vmem:[%s2 + $0x70] sm:$0xff]
    %v61 = vld [vmem:[%s2 + $0x78] sm:$0xff]
    %v62 = vld [vmem:[%s2 + $0x80] sm:$0xff]
    %v63 = vld [vmem:[%s2 + $0x88] sm:$0xff]
    %v64 = vld [vmem:[%s2 + $0x90] sm:$0xff]
    %v65 = vld [vmem:[%s2 + $0x98] sm:$0xff]
    %v66 = vld [vmem:[%s2 + $0xa0] sm:$0xff]
    %v67 = vld [vmem:[%s2 + $0xa8] sm:$0xff]
    %v68 = vld [vmem:[%s2 + $0xb0] sm:$0xff]
    %v69 = vld [vmem:[%s2 + $0xb8] sm:$0xff]
    %v70 = vld [vmem:[%s2 + $0xc0] sm:$0xff]
    %v71 = vld [vmem:[%s2 + $0xc8] sm:$0xff]
    %v72 = vld [vmem:[%s2 + $0xd0] sm:$0xff]
    %v73 = vld [vmem:[%s2 + $0xd8] sm:$0xff]
    %v74 = vld [vmem:[%s2 + $0xe0] sm:$0xff]
    %v75 = vld [vmem:[%s2 + $0xe8] sm:$0xff]
    %v76 = vld [vmem:[%s2 + $0xf0] sm:$0xff]
    %v77 = vld [vmem:[%s2 + $0xf8] sm:$0xff]
    %v78 = vld [vmem:[%s1] sm:$0xf]
    %v80 = vlaneseq
    %v81 = vshrl.u32 %v80, 7
    %v82 = vsub.s32 0, %v81
    %v83 = vrot.slane %v78, %v82
    %v84 = vlaneseq
    %v85 = vshrl.u32 %v84, 7
    %v86 = vsub.s32 1, %v85
    %v87 = vrot.slane %v78, %v86
    %v88 = vlaneseq
    %v89 = vshrl.u32 %v88, 7
    %v90 = vsub.s32 2, %v89
    %v91 = vrot.slane %v78, %v90
    %v92 = vlaneseq
    %v93 = vshrl.u32 %v92, 7
    %v94 = vsub.s32 3, %v93
    %v95 = vrot.slane %v78, %v94
    %v102 = vunpack.c.l.b16 %v44
    %v103 = vunpack.c.l.b16 %v45
    %v104 = vpack.c.b16 %v103, %v102
    %v138 = vunpack.c.l.b16 %v46
    %v139 = vunpack.c.h.b16 %v46
    %v140 = vunpack.c.l.b16 %v47
    %v141 = vunpack.c.h.b16 %v47
    %v142 = vunpack.c.l.b16 %v48
    %v143 = vunpack.c.h.b16 %v48
    %v144 = vunpack.c.l.b16 %v49
    %v145 = vunpack.c.h.b16 %v49
    %v146 = vunpack.c.l.b16 %v50
    %v147 = vunpack.c.h.b16 %v50
    %v148 = vunpack.c.l.b16 %v51
    %v149 = vunpack.c.h.b16 %v51
    %v150 = vunpack.c.l.b16 %v52
    %v151 = vunpack.c.h.b16 %v52
    %v152 = vunpack.c.l.b16 %v53
    %v153 = vunpack.c.h.b16 %v53
    %v154 = vunpack.c.l.b16 %v54
    %v155 = vunpack.c.h.b16 %v54
    %v156 = vunpack.c.l.b16 %v55
    %v157 = vunpack.c.h.b16 %v55
    %v158 = vunpack.c.l.b16 %v56
    %v159 = vunpack.c.h.b16 %v56
    %v160 = vunpack.c.l.b16 %v57
    %v161 = vunpack.c.h.b16 %v57
    %v162 = vunpack.c.l.b16 %v58
    %v163 = vunpack.c.h.b16 %v58
    %v164 = vunpack.c.l.b16 %v59
    %v165 = vunpack.c.h.b16 %v59
    %v166 = vunpack.c.l.b16 %v60
    %v167 = vunpack.c.h.b16 %v60
    %v168 = vunpack.c.l.b16 %v61
    %v169 = vunpack.c.h.b16 %v61
    %v170 = vunpack.c.l.b16 %v62
    %v171 = vunpack.c.h.b16 %v62
    %v172 = vunpack.c.l.b16 %v63
    %v173 = vunpack.c.h.b16 %v63
    %v174 = vunpack.c.l.b16 %v64
    %v175 = vunpack.c.h.b16 %v64
    %v176 = vunpack.c.l.b16 %v65
    %v177 = vunpack.c.h.b16 %v65
    %v178 = vunpack.c.l.b16 %v66
    %v179 = vunpack.c.h.b16 %v66
    %v180 = vunpack.c.l.b16 %v67
    %v181 = vunpack.c.h.b16 %v67
    %v182 = vunpack.c.l.b16 %v68
    %v183 = vunpack.c.h.b16 %v68
    %v184 = vunpack.c.l.b16 %v69
    %v185 = vunpack.c.h.b16 %v69
    %v186 = vunpack.c.l.b16 %v70
    %v187 = vunpack.c.h.b16 %v70
    %v188 = vunpack.c.l.b16 %v71
    %v189 = vunpack.c.h.b16 %v71
    %v190 = vunpack.c.l.b16 %v72
    %v191 = vunpack.c.h.b16 %v72
    %v192 = vunpack.c.l.b16 %v73
    %v193 = vunpack.c.h.b16 %v73
    %v194 = vunpack.c.l.b16 %v74
    %v195 = vunpack.c.h.b16 %v74
    %v196 = vunpack.c.l.b16 %v75
    %v197 = vunpack.c.h.b16 %v75
    %v198 = vunpack.c.l.b16 %v76
    %v199 = vunpack.c.h.b16 %v76
    %v200 = vunpack.c.l.b16 %v77
    %v201 = vunpack.c.h.b16 %v77
    %v202 = vpack.c.b16 %v142, %v138
    %v203 = vpack.c.b16 %v143, %v139
    %v204 = vpack.c.b16 %v144, %v140
    %v205 = vpack.c.b16 %v145, %v141
    %v206 = vpack.c.b16 %v150, %v146
    %v207 = vpack.c.b16 %v151, %v147
    %v208 = vpack.c.b16 %v152, %v148
    %v209 = vpack.c.b16 %v153, %v149
    %v210 = vpack.c.b16 %v158, %v154
    %v211 = vpack.c.b16 %v159, %v155
    %v212 = vpack.c.b16 %v160, %v156
    %v213 = vpack.c.b16 %v161, %v157
    %v214 = vpack.c.b16 %v166, %v162
    %v215 = vpack.c.b16 %v167, %v163
    %v216 = vpack.c.b16 %v168, %v164
    %v217 = vpack.c.b16 %v169, %v165
    %v218 = vpack.c.b16 %v174, %v170
    %v219 = vpack.c.b16 %v175, %v171
    %v220 = vpack.c.b16 %v176, %v172
    %v221 = vpack.c.b16 %v177, %v173
    %v222 = vpack.c.b16 %v182, %v178
    %v223 = vpack.c.b16 %v183, %v179
    %v224 = vpack.c.b16 %v184, %v180
    %v225 = vpack.c.b16 %v185, %v181
    %v226 = vpack.c.b16 %v190, %v186
    %v227 = vpack.c.b16 %v191, %v187
    %v228 = vpack.c.b16 %v192, %v188
    %v229 = vpack.c.b16 %v193, %v189
    %v230 = vpack.c.b16 %v198, %v194
    %v231 = vpack.c.b16 %v199, %v195
    %v232 = vpack.c.b16 %v200, %v196
    %v233 = vpack.c.b16 %v201, %v197
    %266 = vmatprep.subr.bf16.mxu0 %v203
    %267 = vmatpush1.bf16.msra.mxu0 %v202
    %268 = vmatprep.subr.bf16.mxu0 %v207
    %269 = vmatpush1.bf16.msra.mxu0 %v206
    %270 = vmatprep.subr.bf16.mxu0 %v211
    %271 = vmatpush1.bf16.msra.mxu0 %v210
    %272 = vmatprep.subr.bf16.mxu0 %v215
    %273 = vmatpush1.bf16.msra.mxu0 %v214
    %274 = vmatprep.subr.bf16.mxu0 %v219
    %275 = vmatpush1.bf16.msra.mxu0 %v218
    %276 = vmatprep.subr.bf16.mxu0 %v223
    %277 = vmatpush1.bf16.msra.mxu0 %v222
    %278 = vmatprep.subr.bf16.mxu0 %v227
    %279 = vmatpush1.bf16.msra.mxu0 %v226
    %280 = vmatprep.subr.bf16.mxu0 %v231
    %281 = vmatpush1.bf16.msra.mxu0 %v230
    %282 = vmatprep.subr.bf16.mxu0 0
    %283 = vmatpush1.bf16.msra.mxu0 0
    %284 = vmatprep.subr.bf16.mxu0 0
    %285 = vmatpush1.bf16.msra.mxu0 0
    %286 = vmatprep.subr.bf16.mxu0 0
    %287 = vmatpush1.bf16.msra.mxu0 0
    %288 = vmatprep.subr.bf16.mxu0 0
    %289 = vmatpush1.bf16.msra.mxu0 0
    %290 = vmatprep.subr.bf16.mxu0 0
    %291 = vmatpush1.bf16.msra.mxu0 0
    %292 = vmatprep.subr.bf16.mxu0 0
    %293 = vmatpush1.bf16.msra.mxu0 0
    %294 = vmatprep.subr.bf16.mxu0 0
    %295 = vmatpush1.bf16.msra.mxu0 0
    %296 = vmatprep.subr.bf16.mxu0 0
    %297 = vmatpush1.bf16.msra.mxu0 0
    %298 = vmatprep.mubr.bf16.mxu0 0
    %299 = vmatmul.mubr.bf16.gmra.mrb[0].mxu0 %v104
    %v300 = vpop.f32.mrb[0].mxu0
    %v301 = vadd.f32 %v83, %v300
    %v302 = vpop.f32.mrb[0].mxu0
    %v303 = vadd.f32 %v87, %v302
    %v304 = vpop.f32.mrb[0].mxu0
    %v305 = vadd.f32 %v83, %v304
    %v306 = vpop.f32.mrb[0].mxu0
    %v307 = vadd.f32 %v87, %v306
    %308 = vdwg.mxu0
    %309 = vmatprep.subr.bf16.mxu0 %v205
    %310 = vmatpush1.bf16.msra.mxu0 %v204
    %311 = vmatprep.subr.bf16.mxu0 %v209
    %312 = vmatpush1.bf16.msra.mxu0 %v208
    %313 = vmatprep.subr.bf16.mxu0 %v213
    %314 = vmatpush1.bf16.msra.mxu0 %v212
    %315 = vmatprep.subr.bf16.mxu0 %v217
    %316 = vmatpush1.bf16.msra.mxu0 %v216
    %317 = vmatprep.subr.bf16.mxu0 %v221
    %318 = vmatpush1.bf16.msra.mxu0 %v220
    %319 = vmatprep.subr.bf16.mxu0 %v225
    %320 = vmatpush1.bf16.msra.mxu0 %v224
    %321 = vmatprep.subr.bf16.mxu0 %v229
    %322 = vmatpush1.bf16.msra.mxu0 %v228
    %323 = vmatprep.subr.bf16.mxu0 %v233
    %324 = vmatpush1.bf16.msra.mxu0 %v232
    %325 = vmatprep.subr.bf16.mxu0 0
    %326 = vmatpush1.bf16.msra.mxu0 0
    %327 = vmatprep.subr.bf16.mxu0 0
    %328 = vmatpush1.bf16.msra.mxu0 0
    %329 = vmatprep.subr.bf16.mxu0 0
    %330 = vmatpush1.bf16.msra.mxu0 0
    %331 = vmatprep.subr.bf16.mxu0 0
    %332 = vmatpush1.bf16.msra.mxu0 0
    %333 = vmatprep.subr.bf16.mxu0 0
    %334 = vmatpush1.bf16.msra.mxu0 0
    %335 = vmatprep.subr.bf16.mxu0 0
    %336 = vmatpush1.bf16.msra.mxu0 0
    %337 = vmatprep.subr.bf16.mxu0 0
    %338 = vmatpush1.bf16.msra.mxu0 0
    %339 = vmatprep.subr.bf16.mxu0 0
    %340 = vmatpush1.bf16.msra.mxu0 0
    %341 = vmatprep.mubr.bf16.mxu0 0
    %342 = vmatmul.mubr.bf16.gmra.mrb[0].mxu0 %v104
    %v343 = vpop.f32.mrb[0].mxu0
    %v344 = vadd.f32 %v91, %v343
    %v345 = vpop.f32.mrb[0].mxu0
    %v346 = vadd.f32 %v95, %v345
    %v347 = vpop.f32.mrb[0].mxu0
    %v348 = vadd.f32 %v91, %v347
    %v349 = vpop.f32.mrb[0].mxu0
    %v350 = vadd.f32 %v95, %v349
    %351 = vdwg.mxu0
    %v352 = vmax.f32 %v301, 0.0
    %v353 = vmax.f32 %v303, 0.0
    %v354 = vmax.f32 %v344, 0.0
    %v355 = vmax.f32 %v346, 0.0
    %v356 = vmax.f32 %v305, 0.0
    %v357 = vmax.f32 %v307, 0.0
    %v358 = vmax.f32 %v348, 0.0
    %v359 = vmax.f32 %v350, 0.0
    %v360 = vld [vmem:[%s7] ss:$8 sm:$0x7]
    %v361 = vpack.c.bf16 %v356, %v352
    %v362 = vpack.c.bf16 %v357, %v353
    %v363 = vpack.c.bf16 %v358, %v354
    %v364 = vpack.c.bf16 %v359, %v355
    %v365 = vld [vmem:[%s3] sm:$0xff]
    %v366 = vld [vmem:[%s3 + $0x8] sm:$0xf]
    %v367 = vld [vmem:[%s3 + $0xc] sm:$0xff]
    %v368 = vld [vmem:[%s3 + $0x14] sm:$0xf]
    %v369 = vld [vmem:[%s3 + $0x18] sm:$0xff]
    %v370 = vld [vmem:[%s3 + $0x20] sm:$0xf]
    %v371 = vld [vmem:[%s3 + $0x24] sm:$0xff]
    %v372 = vld [vmem:[%s3 + $0x2c] sm:$0xf]
    %v373 = vld [vmem:[%s3 + $0x30] sm:$0xff]
    %v374 = vld [vmem:[%s3 + $0x38] sm:$0xf]
    %v375 = vld [vmem:[%s3 + $0x3c] sm:$0xff]
    %v376 = vld [vmem:[%s3 + $0x44] sm:$0xf]
    %v377 = vld [vmem:[%s3 + $0x48] sm:$0xff]
    %v378 = vld [vmem:[%s3 + $0x50] sm:$0xf]
    %v379 = vld [vmem:[%s3 + $0x54] sm:$0xff]
    %v380 = vld [vmem:[%s3 + $0x5c] sm:$0xf]
    %v381 = vld [vmem:[%s3 + $0x60] sm:$0xff]
    %v382 = vld [vmem:[%s3 + $0x68] sm:$0xf]
    %v383 = vld [vmem:[%s3 + $0x6c] sm:$0xff]
    %v384 = vld [vmem:[%s3 + $0x74] sm:$0xf]
    %v385 = vld [vmem:[%s3 + $0x78] sm:$0xff]
    %v386 = vld [vmem:[%s3 + $0x80] sm:$0xf]
    %v387 = vld [vmem:[%s3 + $0x84] sm:$0xff]
    %v388 = vld [vmem:[%s3 + $0x8c] sm:$0xf]
    %v389 = vld [vmem:[%s3 + $0x90] sm:$0xff]
    %v390 = vld [vmem:[%s3 + $0x98] sm:$0xf]
    %v391 = vld [vmem:[%s3 + $0x9c] sm:$0xff]
    %v392 = vld [vmem:[%s3 + $0xa4] sm:$0xf]
    %v393 = vld [vmem:[%s3 + $0xa8] sm:$0xff]
    %v394 = vld [vmem:[%s3 + $0xb0] sm:$0xf]
    %v395 = vld [vmem:[%s3 + $0xb4] sm:$0xff]
    %v396 = vld [vmem:[%s3 + $0xbc] sm:$0xf]
    %v397 = vld [vmem:[%s3 + $0xc0] sm:$0xff]
    %v398 = vld [vmem:[%s3 + $0xc8] sm:$0xf]
    %v399 = vld [vmem:[%s3 + $0xcc] sm:$0xff]
    %v400 = vld [vmem:[%s3 + $0xd4] sm:$0xf]
    %v401 = vld [vmem:[%s3 + $0xd8] sm:$0xff]
    %v402 = vld [vmem:[%s3 + $0xe0] sm:$0xf]
    %v403 = vld [vmem:[%s3 + $0xe4] sm:$0xff]
    %v404 = vld [vmem:[%s3 + $0xec] sm:$0xf]
    %v405 = vld [vmem:[%s3 + $0xf0] sm:$0xff]
    %v406 = vld [vmem:[%s3 + $0xf8] sm:$0xf]
    %v407 = vld [vmem:[%s3 + $0xfc] sm:$0xff]
    %v408 = vld [vmem:[%s3 + $0x104] sm:$0xf]
    %v409 = vld [vmem:[%s3 + $0x108] sm:$0xff]
    %v410 = vld [vmem:[%s3 + $0x110] sm:$0xf]
    %v411 = vld [vmem:[%s3 + $0x114] sm:$0xff]
    %v412 = vld [vmem:[%s3 + $0x11c] sm:$0xf]
    %v413 = vld [vmem:[%s3 + $0x120] sm:$0xff]
    %v414 = vld [vmem:[%s3 + $0x128] sm:$0xf]
    %v415 = vld [vmem:[%s3 + $0x12c] sm:$0xff]
    %v416 = vld [vmem:[%s3 + $0x134] sm:$0xf]
    %v417 = vld [vmem:[%s3 + $0x138] sm:$0xff]
    %v418 = vld [vmem:[%s3 + $0x140] sm:$0xf]
    %v419 = vld [vmem:[%s3 + $0x144] sm:$0xff]
    %v420 = vld [vmem:[%s3 + $0x14c] sm:$0xf]
    %v421 = vld [vmem:[%s3 + $0x150] sm:$0xff]
    %v422 = vld [vmem:[%s3 + $0x158] sm:$0xf]
    %v423 = vld [vmem:[%s3 + $0x15c] sm:$0xff]
    %v424 = vld [vmem:[%s3 + $0x164] sm:$0xf]
    %v425 = vld [vmem:[%s3 + $0x168] sm:$0xff]
    %v426 = vld [vmem:[%s3 + $0x170] sm:$0xf]
    %v427 = vld [vmem:[%s3 + $0x174] sm:$0xff]
    %v428 = vld [vmem:[%s3 + $0x17c] sm:$0xf]
    %v429 = vld [vmem:[%s3 + $0x180] sm:$0xff]
    %v430 = vld [vmem:[%s3 + $0x188] sm:$0xf]
    %v431 = vld [vmem:[%s3 + $0x18c] sm:$0xff]
    %v432 = vld [vmem:[%s3 + $0x194] sm:$0xf]
    %v433 = vld [vmem:[%s3 + $0x198] sm:$0xff]
    %v434 = vld [vmem:[%s3 + $0x1a0] sm:$0xf]
    %v435 = vld [vmem:[%s3 + $0x1a4] sm:$0xff]
    %v436 = vld [vmem:[%s3 + $0x1ac] sm:$0xf]
    %v437 = vld [vmem:[%s3 + $0x1b0] sm:$0xff]
    %v438 = vld [vmem:[%s3 + $0x1b8] sm:$0xf]
    %v439 = vld [vmem:[%s3 + $0x1bc] sm:$0xff]
    %v440 = vld [vmem:[%s3 + $0x1c4] sm:$0xf]
    %v441 = vld [vmem:[%s3 + $0x1c8] sm:$0xff]
    %v442 = vld [vmem:[%s3 + $0x1d0] sm:$0xf]
    %v443 = vld [vmem:[%s3 + $0x1d4] sm:$0xff]
    %v444 = vld [vmem:[%s3 + $0x1dc] sm:$0xf]
    %v445 = vld [vmem:[%s3 + $0x1e0] sm:$0xff]
    %v446 = vld [vmem:[%s3 + $0x1e8] sm:$0xf]
    %v447 = vld [vmem:[%s3 + $0x1ec] sm:$0xff]
    %v448 = vld [vmem:[%s3 + $0x1f4] sm:$0xf]
    %v449 = vld [vmem:[%s3 + $0x1f8] sm:$0xff]
    %v450 = vld [vmem:[%s3 + $0x200] sm:$0xf]
    %v451 = vld [vmem:[%s3 + $0x204] sm:$0xff]
    %v452 = vld [vmem:[%s3 + $0x20c] sm:$0xf]
    %v453 = vld [vmem:[%s3 + $0x210] sm:$0xff]
    %v454 = vld [vmem:[%s3 + $0x218] sm:$0xf]
    %v455 = vld [vmem:[%s3 + $0x21c] sm:$0xff]
    %v456 = vld [vmem:[%s3 + $0x224] sm:$0xf]
    %v457 = vld [vmem:[%s3 + $0x228] sm:$0xff]
    %v458 = vld [vmem:[%s3 + $0x230] sm:$0xf]
    %v459 = vld [vmem:[%s3 + $0x234] sm:$0xff]
    %v460 = vld [vmem:[%s3 + $0x23c] sm:$0xf]
    %v461 = vld [vmem:[%s3 + $0x240] sm:$0xff]
    %v462 = vld [vmem:[%s3 + $0x248] sm:$0xf]
    %v463 = vld [vmem:[%s3 + $0x24c] sm:$0xff]
    %v464 = vld [vmem:[%s3 + $0x254] sm:$0xf]
    %v465 = vld [vmem:[%s3 + $0x258] sm:$0xff]
    %v466 = vld [vmem:[%s3 + $0x260] sm:$0xf]
    %v467 = vld [vmem:[%s3 + $0x264] sm:$0xff]
    %v468 = vld [vmem:[%s3 + $0x26c] sm:$0xf]
    %v469 = vld [vmem:[%s3 + $0x270] sm:$0xff]
    %v470 = vld [vmem:[%s3 + $0x278] sm:$0xf]
    %v471 = vld [vmem:[%s3 + $0x27c] sm:$0xff]
    %v472 = vld [vmem:[%s3 + $0x284] sm:$0xf]
    %v473 = vld [vmem:[%s3 + $0x288] sm:$0xff]
    %v474 = vld [vmem:[%s3 + $0x290] sm:$0xf]
    %v475 = vld [vmem:[%s3 + $0x294] sm:$0xff]
    %v476 = vld [vmem:[%s3 + $0x29c] sm:$0xf]
    %v478 = vlaneseq
    %v479 = vshrl.u32 %v478, 7
    %v480 = vsub.s32 0, %v479
    %v481 = vrot.slane %v360, %v480
    %v482 = vlaneseq
    %v483 = vshrl.u32 %v482, 7
    %v484 = vsub.s32 1, %v483
    %v485 = vrot.slane %v360, %v484
    %v486 = vlaneseq
    %v487 = vshrl.u32 %v486, 7
    %v488 = vsub.s32 2, %v487
    %v489 = vrot.slane %v360, %v488
    %v605 = vunpack.c.l.b16 %v365
    %v606 = vunpack.c.h.b16 %v365
    %v607 = vunpack.c.l.b16 %v366
    %v608 = vunpack.c.l.b16 %v367
    %v609 = vunpack.c.h.b16 %v367
    %v610 = vunpack.c.l.b16 %v368
    %v611 = vunpack.c.l.b16 %v369
    %v612 = vunpack.c.h.b16 %v369
    %v613 = vunpack.c.l.b16 %v370
    %v614 = vunpack.c.l.b16 %v371
    %v615 = vunpack.c.h.b16 %v371
    %v616 = vunpack.c.l.b16 %v372
    %v617 = vunpack.c.l.b16 %v373
    %v618 = vunpack.c.h.b16 %v373
    %v619 = vunpack.c.l.b16 %v374
    %v620 = vunpack.c.l.b16 %v375
    %v621 = vunpack.c.h.b16 %v375
    %v622 = vunpack.c.l.b16 %v376
    %v623 = vunpack.c.l.b16 %v377
    %v624 = vunpack.c.h.b16 %v377
    %v625 = vunpack.c.l.b16 %v378
    %v626 = vunpack.c.l.b16 %v379
    %v627 = vunpack.c.h.b16 %v379
    %v628 = vunpack.c.l.b16 %v380
    %v629 = vunpack.c.l.b16 %v381
    %v630 = vunpack.c.h.b16 %v381
    %v631 = vunpack.c.l.b16 %v382
    %v632 = vunpack.c.l.b16 %v383
    %v633 = vunpack.c.h.b16 %v383
    %v634 = vunpack.c.l.b16 %v384
    %v635 = vunpack.c.l.b16 %v385
    %v636 = vunpack.c.h.b16 %v385
    %v637 = vunpack.c.l.b16 %v386
    %v638 = vunpack.c.l.b16 %v387
    %v639 = vunpack.c.h.b16 %v387
    %v640 = vunpack.c.l.b16 %v388
    %v641 = vunpack.c.l.b16 %v389
    %v642 = vunpack.c.h.b16 %v389
    %v643 = vunpack.c.l.b16 %v390
    %v644 = vunpack.c.l.b16 %v391
    %v645 = vunpack.c.h.b16 %v391
    %v646 = vunpack.c.l.b16 %v392
    %v647 = vunpack.c.l.b16 %v393
    %v648 = vunpack.c.h.b16 %v393
    %v649 = vunpack.c.l.b16 %v394
    %v650 = vunpack.c.l.b16 %v395
    %v651 = vunpack.c.h.b16 %v395
    %v652 = vunpack.c.l.b16 %v396
    %v653 = vunpack.c.l.b16 %v397
    %v654 = vunpack.c.h.b16 %v397
    %v655 = vunpack.c.l.b16 %v398
    %v656 = vunpack.c.l.b16 %v399
    %v657 = vunpack.c.h.b16 %v399
    %v658 = vunpack.c.l.b16 %v400
    %v659 = vunpack.c.l.b16 %v401
    %v660 = vunpack.c.h.b16 %v401
    %v661 = vunpack.c.l.b16 %v402
    %v662 = vunpack.c.l.b16 %v403
    %v663 = vunpack.c.h.b16 %v403
    %v664 = vunpack.c.l.b16 %v404
    %v665 = vunpack.c.l.b16 %v405
    %v666 = vunpack.c.h.b16 %v405
    %v667 = vunpack.c.l.b16 %v406
    %v668 = vunpack.c.l.b16 %v407
    %v669 = vunpack.c.h.b16 %v407
    %v670 = vunpack.c.l.b16 %v408
    %v671 = vunpack.c.l.b16 %v409
    %v672 = vunpack.c.h.b16 %v409
    %v673 = vunpack.c.l.b16 %v410
    %v674 = vunpack.c.l.b16 %v411
    %v675 = vunpack.c.h.b16 %v411
    %v676 = vunpack.c.l.b16 %v412
    %v677 = vunpack.c.l.b16 %v413
    %v678 = vunpack.c.h.b16 %v413
    %v679 = vunpack.c.l.b16 %v414
    %v680 = vunpack.c.l.b16 %v415
    %v681 = vunpack.c.h.b16 %v415
    %v682 = vunpack.c.l.b16 %v416
    %v683 = vunpack.c.l.b16 %v417
    %v684 = vunpack.c.h.b16 %v417
    %v685 = vunpack.c.l.b16 %v418
    %v686 = vunpack.c.l.b16 %v419
    %v687 = vunpack.c.h.b16 %v419
    %v688 = vunpack.c.l.b16 %v420
    %v689 = vunpack.c.l.b16 %v421
    %v690 = vunpack.c.h.b16 %v421
    %v691 = vunpack.c.l.b16 %v422
    %v692 = vunpack.c.l.b16 %v423
    %v693 = vunpack.c.h.b16 %v423
    %v694 = vunpack.c.l.b16 %v424
    %v695 = vunpack.c.l.b16 %v425
    %v696 = vunpack.c.h.b16 %v425
    %v697 = vunpack.c.l.b16 %v426
    %v698 = vunpack.c.l.b16 %v427
    %v699 = vunpack.c.h.b16 %v427
    %v700 = vunpack.c.l.b16 %v428
    %v701 = vunpack.c.l.b16 %v429
    %v702 = vunpack.c.h.b16 %v429
    %v703 = vunpack.c.l.b16 %v430
    %v704 = vunpack.c.l.b16 %v431
    %v705 = vunpack.c.h.b16 %v431
    %v706 = vunpack.c.l.b16 %v432
    %v707 = vunpack.c.l.b16 %v433
    %v708 = vunpack.c.h.b16 %v433
    %v709 = vunpack.c.l.b16 %v434
    %v710 = vunpack.c.l.b16 %v435
    %v711 = vunpack.c.h.b16 %v435
    %v712 = vunpack.c.l.b16 %v436
    %v713 = vunpack.c.l.b16 %v437
    %v714 = vunpack.c.h.b16 %v437
    %v715 = vunpack.c.l.b16 %v438
    %v716 = vunpack.c.l.b16 %v439
    %v717 = vunpack.c.h.b16 %v439
    %v718 = vunpack.c.l.b16 %v440
    %v719 = vunpack.c.l.b16 %v441
    %v720 = vunpack.c.h.b16 %v441
    %v721 = vunpack.c.l.b16 %v442
    %v722 = vunpack.c.l.b16 %v443
    %v723 = vunpack.c.h.b16 %v443
    %v724 = vunpack.c.l.b16 %v444
    %v725 = vunpack.c.l.b16 %v445
    %v726 = vunpack.c.h.b16 %v445
    %v727 = vunpack.c.l.b16 %v446
    %v728 = vunpack.c.l.b16 %v447
    %v729 = vunpack.c.h.b16 %v447
    %v730 = vunpack.c.l.b16 %v448
    %v731 = vunpack.c.l.b16 %v449
    %v732 = vunpack.c.h.b16 %v449
    %v733 = vunpack.c.l.b16 %v450
    %v734 = vunpack.c.l.b16 %v451
    %v735 = vunpack.c.h.b16 %v451
    %v736 = vunpack.c.l.b16 %v452
    %v737 = vunpack.c.l.b16 %v453
    %v738 = vunpack.c.h.b16 %v453
    %v739 = vunpack.c.l.b16 %v454
    %v740 = vunpack.c.l.b16 %v455
    %v741 = vunpack.c.h.b16 %v455
    %v742 = vunpack.c.l.b16 %v456
    %v743 = vunpack.c.l.b16 %v457
    %v744 = vunpack.c.h.b16 %v457
    %v745 = vunpack.c.l.b16 %v458
    %v746 = vunpack.c.l.b16 %v459
    %v747 = vunpack.c.h.b16 %v459
    %v748 = vunpack.c.l.b16 %v460
    %v749 = vunpack.c.l.b16 %v461
    %v750 = vunpack.c.h.b16 %v461
    %v751 = vunpack.c.l.b16 %v462
    %v752 = vunpack.c.l.b16 %v463
    %v753 = vunpack.c.h.b16 %v463
    %v754 = vunpack.c.l.b16 %v464
    %v755 = vunpack.c.l.b16 %v465
    %v756 = vunpack.c.h.b16 %v465
    %v757 = vunpack.c.l.b16 %v466
    %v758 = vunpack.c.l.b16 %v467
    %v759 = vunpack.c.h.b16 %v467
    %v760 = vunpack.c.l.b16 %v468
    %v761 = vunpack.c.l.b16 %v469
    %v762 = vunpack.c.h.b16 %v469
    %v763 = vunpack.c.l.b16 %v470
    %v764 = vunpack.c.l.b16 %v471
    %v765 = vunpack.c.h.b16 %v471
    %v766 = vunpack.c.l.b16 %v472
    %v767 = vunpack.c.l.b16 %v473
    %v768 = vunpack.c.h.b16 %v473
    %v769 = vunpack.c.l.b16 %v474
    %v770 = vunpack.c.l.b16 %v475
    %v771 = vunpack.c.h.b16 %v475
    %v772 = vunpack.c.l.b16 %v476
    %v773 = vpack.c.b16 %v608, %v605
    %v774 = vpack.c.b16 %v609, %v606
    %v775 = vpack.c.b16 %v610, %v607
    %v776 = vpack.c.b16 %v614, %v611
    %v777 = vpack.c.b16 %v615, %v612
    %v778 = vpack.c.b16 %v616, %v613
    %v779 = vpack.c.b16 %v620, %v617
    %v780 = vpack.c.b16 %v621, %v618
    %v781 = vpack.c.b16 %v622, %v619
    %v782 = vpack.c.b16 %v626, %v623
    %v783 = vpack.c.b16 %v627, %v624
    %v784 = vpack.c.b16 %v628, %v625
    %v785 = vpack.c.b16 %v632, %v629
    %v786 = vpack.c.b16 %v633, %v630
    %v787 = vpack.c.b16 %v634, %v631
    %v788 = vpack.c.b16 %v638, %v635
    %v789 = vpack.c.b16 %v639, %v636
    %v790 = vpack.c.b16 %v640, %v637
    %v791 = vpack.c.b16 %v644, %v641
    %v792 = vpack.c.b16 %v645, %v642
    %v793 = vpack.c.b16 %v646, %v643
    %v794 = vpack.c.b16 %v650, %v647
    %v795 = vpack.c.b16 %v651, %v648
    %v796 = vpack.c.b16 %v652, %v649
    %v797 = vpack.c.b16 %v656, %v653
    %v798 = vpack.c.b16 %v657, %v654
    %v799 = vpack.c.b16 %v658, %v655
    %v800 = vpack.c.b16 %v662, %v659
    %v801 = vpack.c.b16 %v663, %v660
    %v802 = vpack.c.b16 %v664, %v661
    %v803 = vpack.c.b16 %v668, %v665
    %v804 = vpack.c.b16 %v669, %v666
    %v805 = vpack.c.b16 %v670, %v667
    %v806 = vpack.c.b16 %v674, %v671
    %v807 = vpack.c.b16 %v675, %v672
    %v808 = vpack.c.b16 %v676, %v673
    %v809 = vpack.c.b16 %v680, %v677
    %v810 = vpack.c.b16 %v681, %v678
    %v811 = vpack.c.b16 %v682, %v679
    %v812 = vpack.c.b16 %v686, %v683
    %v813 = vpack.c.b16 %v687, %v684
    %v814 = vpack.c.b16 %v688, %v685
    %v815 = vpack.c.b16 %v692, %v689
    %v816 = vpack.c.b16 %v693, %v690
    %v817 = vpack.c.b16 %v694, %v691
    %v818 = vpack.c.b16 %v698, %v695
    %v819 = vpack.c.b16 %v699, %v696
    %v820 = vpack.c.b16 %v700, %v697
    %v821 = vpack.c.b16 %v704, %v701
    %v822 = vpack.c.b16 %v705, %v702
    %v823 = vpack.c.b16 %v706, %v703
    %v824 = vpack.c.b16 %v710, %v707
    %v825 = vpack.c.b16 %v711, %v708
    %v826 = vpack.c.b16 %v712, %v709
    %v827 = vpack.c.b16 %v716, %v713
    %v828 = vpack.c.b16 %v717, %v714
    %v829 = vpack.c.b16 %v718, %v715
    %v830 = vpack.c.b16 %v722, %v719
    %v831 = vpack.c.b16 %v723, %v720
    %v832 = vpack.c.b16 %v724, %v721
    %v833 = vpack.c.b16 %v728, %v725
    %v834 = vpack.c.b16 %v729, %v726
    %v835 = vpack.c.b16 %v730, %v727
    %v836 = vpack.c.b16 %v734, %v731
    %v837 = vpack.c.b16 %v735, %v732
    %v838 = vpack.c.b16 %v736, %v733
    %v839 = vpack.c.b16 %v740, %v737
    %v840 = vpack.c.b16 %v741, %v738
    %v841 = vpack.c.b16 %v742, %v739
    %v842 = vpack.c.b16 %v746, %v743
    %v843 = vpack.c.b16 %v747, %v744
    %v844 = vpack.c.b16 %v748, %v745
    %v845 = vpack.c.b16 %v752, %v749
    %v846 = vpack.c.b16 %v753, %v750
    %v847 = vpack.c.b16 %v754, %v751
    %v848 = vpack.c.b16 %v758, %v755
    %v849 = vpack.c.b16 %v759, %v756
    %v850 = vpack.c.b16 %v760, %v757
    %v851 = vpack.c.b16 %v764, %v761
    %v852 = vpack.c.b16 %v765, %v762
    %v853 = vpack.c.b16 %v766, %v763
    %v854 = vpack.c.b16 %v770, %v767
    %v855 = vpack.c.b16 %v771, %v768
    %v856 = vpack.c.b16 %v772, %v769
    %vm941 = vcmask 523264
    %v943 = vsel %vm941, %v364, 0
    %945 = vmatprep.subr.bf16.mxu0 %v774
    %946 = vmatpush1.bf16.msra.mxu0 %v773
    %947 = vmatprep.subr.bf16.mxu0 %v777
    %948 = vmatpush1.bf16.msra.mxu0 %v776
    %949 = vmatprep.subr.bf16.mxu0 %v780
    %950 = vmatpush1.bf16.msra.mxu0 %v779
    %951 = vmatprep.subr.bf16.mxu0 %v783
    %952 = vmatpush1.bf16.msra.mxu0 %v782
    %953 = vmatprep.subr.bf16.mxu0 %v786
    %954 = vmatpush1.bf16.msra.mxu0 %v785
    %955 = vmatprep.subr.bf16.mxu0 %v789
    %956 = vmatpush1.bf16.msra.mxu0 %v788
    %957 = vmatprep.subr.bf16.mxu0 %v792
    %958 = vmatpush1.bf16.msra.mxu0 %v791
    %959 = vmatprep.subr.bf16.mxu0 %v795
    %960 = vmatpush1.bf16.msra.mxu0 %v794
    %961 = vmatprep.subr.bf16.mxu0 %v798
    %962 = vmatpush1.bf16.msra.mxu0 %v797
    %963 = vmatprep.subr.bf16.mxu0 %v801
    %964 = vmatpush1.bf16.msra.mxu0 %v800
    %965 = vmatprep.subr.bf16.mxu0 %v804
    %966 = vmatpush1.bf16.msra.mxu0 %v803
    %967 = vmatprep.subr.bf16.mxu0 %v807
    %968 = vmatpush1.bf16.msra.mxu0 %v806
    %969 = vmatprep.subr.bf16.mxu0 %v810
    %970 = vmatpush1.bf16.msra.mxu0 %v809
    %971 = vmatprep.subr.bf16.mxu0 %v813
    %972 = vmatpush1.bf16.msra.mxu0 %v812
    %973 = vmatprep.subr.bf16.mxu0 %v816
    %974 = vmatpush1.bf16.msra.mxu0 %v815
    %975 = vmatprep.subr.bf16.mxu0 %v819
    %976 = vmatpush1.bf16.msra.mxu0 %v818
    %977 = vmatprep.mubr.bf16.mxu0 %v362
    %978 = vmatmul.mubr.bf16.gmra.mrb[0].mxu0 %v361
    %v979 = vpop.f32.mrb[0].mxu0
    %v980 = vadd.f32 %v481, %v979
    %v981 = vpop.f32.mrb[0].mxu0
    %v982 = vadd.f32 %v485, %v981
    %v983 = vpop.f32.mrb[0].mxu0
    %v984 = vadd.f32 %v481, %v983
    %v985 = vpop.f32.mrb[0].mxu0
    %v986 = vadd.f32 %v485, %v985
    %987 = vdwg.mxu0
    %988 = vmatprep.subr.bf16.mxu0 %v822
    %989 = vmatpush1.bf16.msra.mxu0 %v821
    %990 = vmatprep.subr.bf16.mxu0 %v825
    %991 = vmatpush1.bf16.msra.mxu0 %v824
    %992 = vmatprep.subr.bf16.mxu0 %v828
    %993 = vmatpush1.bf16.msra.mxu0 %v827
    %994 = vmatprep.subr.bf16.mxu0 %v831
    %995 = vmatpush1.bf16.msra.mxu0 %v830
    %996 = vmatprep.subr.bf16.mxu0 %v834
    %997 = vmatpush1.bf16.msra.mxu0 %v833
    %998 = vmatprep.subr.bf16.mxu0 %v837
    %999 = vmatpush1.bf16.msra.mxu0 %v836
    %1000 = vmatprep.subr.bf16.mxu0 %v840
    %1001 = vmatpush1.bf16.msra.mxu0 %v839
    %1002 = vmatprep.subr.bf16.mxu0 %v843
    %1003 = vmatpush1.bf16.msra.mxu0 %v842
    %1004 = vmatprep.subr.bf16.mxu0 %v846
    %1005 = vmatpush1.bf16.msra.mxu0 %v845
    %1006 = vmatprep.subr.bf16.mxu0 %v849
    %1007 = vmatpush1.bf16.msra.mxu0 %v848
    %1008 = vmatprep.subr.bf16.mxu0 %v852
    %1009 = vmatpush1.bf16.msra.mxu0 %v851
    %1010 = vmatprep.subr.bf16.mxu0 %v855
    %1011 = vmatpush1.bf16.msra.mxu0 %v854
    %1012 = vmatprep.subr.bf16.mxu0 0
    %1013 = vmatpush1.bf16.msra.mxu0 0
    %1014 = vmatprep.subr.bf16.mxu0 0
    %1015 = vmatpush1.bf16.msra.mxu0 0
    %1016 = vmatprep.subr.bf16.mxu0 0
    %1017 = vmatpush1.bf16.msra.mxu0 0
    %1018 = vmatprep.subr.bf16.mxu0 0
    %1019 = vmatpush1.bf16.msra.mxu0 0
    %1020 = vmatprep.mubr.bf16.mxu0 %v943
    %1021 = vmatmul.mubr.bf16.gmra.mrb[0].mxu0 %v363
    %v1022 = vpop.f32.mrb[0].mxu0
    %v1023 = vadd.f32 %v980, %v1022
    %v1024 = vpop.f32.mrb[0].mxu0
    %v1025 = vadd.f32 %v982, %v1024
    %v1026 = vpop.f32.mrb[0].mxu0
    %v1027 = vadd.f32 %v984, %v1026
    %v1028 = vpop.f32.mrb[0].mxu0
    %v1029 = vadd.f32 %v986, %v1028
    %1030 = vdwg.mxu0
    %1031 = vmatprep.subr.bf16.mxu0 0
    %1032 = vmatpush1.bf16.msra.mxu0 %v775
    %1033 = vmatprep.subr.bf16.mxu0 0
    %1034 = vmatpush1.bf16.msra.mxu0 %v778
    %1035 = vmatprep.subr.bf16.mxu0 0
    %1036 = vmatpush1.bf16.msra.mxu0 %v781
    %1037 = vmatprep.subr.bf16.mxu0 0
    %1038 = vmatpush1.bf16.msra.mxu0 %v784
    %1039 = vmatprep.subr.bf16.mxu0 0
    %1040 = vmatpush1.bf16.msra.mxu0 %v787
    %1041 = vmatprep.subr.bf16.mxu0 0
    %1042 = vmatpush1.bf16.msra.mxu0 %v790
    %1043 = vmatprep.subr.bf16.mxu0 0
    %1044 = vmatpush1.bf16.msra.mxu0 %v793
    %1045 = vmatprep.subr.bf16.mxu0 0
    %1046 = vmatpush1.bf16.msra.mxu0 %v796
    %1047 = vmatprep.subr.bf16.mxu0 0
    %1048 = vmatpush1.bf16.msra.mxu0 %v799
    %1049 = vmatprep.subr.bf16.mxu0 0
    %1050 = vmatpush1.bf16.msra.mxu0 %v802
    %1051 = vmatprep.subr.bf16.mxu0 0
    %1052 = vmatpush1.bf16.msra.mxu0 %v805
    %1053 = vmatprep.subr.bf16.mxu0 0
    %1054 = vmatpush1.bf16.msra.mxu0 %v808
    %1055 = vmatprep.subr.bf16.mxu0 0
    %1056 = vmatpush1.bf16.msra.mxu0 %v811
    %1057 = vmatprep.subr.bf16.mxu0 0
    %1058 = vmatpush1.bf16.msra.mxu0 %v814
    %1059 = vmatprep.subr.bf16.mxu0 0
    %1060 = vmatpush1.bf16.msra.mxu0 %v817
    %1061 = vmatprep.subr.bf16.mxu0 0
    %1062 = vmatpush1.bf16.msra.mxu0 %v820
    %1063 = vmatprep.mubr.bf16.mxu0 %v362
    %1064 = vmatmul.mubr.bf16.gmra.mrb[0].mxu0 %v361
    %v1065 = vpop.f32.mrb[0].mxu0
    %v1066 = vadd.f32 %v489, %v1065
    %v1067 = vpop.f32.mrb[0].mxu0
    %v1068 = vpop.f32.mrb[0].mxu0
    %v1069 = vadd.f32 %v489, %v1068
    %v1070 = vpop.f32.mrb[0].mxu0
    %1071 = vdwg.mxu0
    %1072 = vmatprep.subr.bf16.mxu0 0
    %1073 = vmatpush1.bf16.msra.mxu0 %v823
    %1074 = vmatprep.subr.bf16.mxu0 0
    %1075 = vmatpush1.bf16.msra.mxu0 %v826
    %1076 = vmatprep.subr.bf16.mxu0 0
    %1077 = vmatpush1.bf16.msra.mxu0 %v829
    %1078 = vmatprep.subr.bf16.mxu0 0
    %1079 = vmatpush1.bf16.msra.mxu0 %v832
    %1080 = vmatprep.subr.bf16.mxu0 0
    %1081 = vmatpush1.bf16.msra.mxu0 %v835
    %1082 = vmatprep.subr.bf16.mxu0 0
    %1083 = vmatpush1.bf16.msra.mxu0 %v838
    %1084 = vmatprep.subr.bf16.mxu0 0
    %1085 = vmatpush1.bf16.msra.mxu0 %v841
    %1086 = vmatprep.subr.bf16.mxu0 0
    %1087 = vmatpush1.bf16.msra.mxu0 %v844
    %1088 = vmatprep.subr.bf16.mxu0 0
    %1089 = vmatpush1.bf16.msra.mxu0 %v847
    %1090 = vmatprep.subr.bf16.mxu0 0
    %1091 = vmatpush1.bf16.msra.mxu0 %v850
    %1092 = vmatprep.subr.bf16.mxu0 0
    %1093 = vmatpush1.bf16.msra.mxu0 %v853
    %1094 = vmatprep.subr.bf16.mxu0 0
    %1095 = vmatpush1.bf16.msra.mxu0 %v856
    %1096 = vmatprep.subr.bf16.mxu0 0
    %1097 = vmatpush1.bf16.msra.mxu0 0
    %1098 = vmatprep.subr.bf16.mxu0 0
    %1099 = vmatpush1.bf16.msra.mxu0 0
    %1100 = vmatprep.subr.bf16.mxu0 0
    %1101 = vmatpush1.bf16.msra.mxu0 0
    %1102 = vmatprep.subr.bf16.mxu0 0
    %1103 = vmatpush1.bf16.msra.mxu0 0
    %1104 = vmatprep.mubr.bf16.mxu0 %v943
    %1105 = vmatmul.mubr.bf16.gmra.mrb[0].mxu0 %v363
    %v1106 = vpop.f32.mrb[0].mxu0
    %v1107 = vadd.f32 %v1066, %v1106
    %v1108 = vpop.f32.mrb[0].mxu0
    %v1109 = vpop.f32.mrb[0].mxu0
    %v1110 = vadd.f32 %v1069, %v1109
    %v1111 = vpop.f32.mrb[0].mxu0
    %1112 = vdwg.mxu0
    %v1113 = vmax.f32 %v1023, 0.0
    %v1114 = vmax.f32 %v1025, 0.0
    %v1115 = vmax.f32 %v1107, 0.0
    %v1116 = vmax.f32 %v1027, 0.0
    %v1117 = vmax.f32 %v1029, 0.0
    %v1118 = vmax.f32 %v1110, 0.0
    %s1119 = scalar_lea.vmem %s7, 1
    %v1120 = vld [vmem:[%s1119] ss:$8 sm:$0x3]
    %v1121 = vpack.c.bf16 %v1116, %v1113
    %v1122 = vpack.c.bf16 %v1117, %v1114
    %v1123 = vpack.c.bf16 %v1118, %v1115
    %v1124 = vld [vmem:[#allocation2] sm:$0xff]
    %v1125 = vld [vmem:[#allocation2 + $0x8] sm:$0xff]
    %v1126 = vld [vmem:[#allocation2 + $0x10] sm:$0xff]
    %v1127 = vld [vmem:[#allocation2 + $0x18] sm:$0xff]
    %v1128 = vld [vmem:[#allocation2 + $0x20] sm:$0xff]
    %v1129 = vld [vmem:[#allocation2 + $0x28] sm:$0xff]
    %v1130 = vld [vmem:[#allocation2 + $0x30] sm:$0xff]
    %v1131 = vld [vmem:[#allocation2 + $0x38] sm:$0xff]
    %v1132 = vld [vmem:[#allocation2 + $0x40] sm:$0xff]
    %v1133 = vld [vmem:[#allocation2 + $0x48] sm:$0xff]
    %v1134 = vld [vmem:[#allocation2 + $0x50] sm:$0xff]
    %v1135 = vld [vmem:[#allocation2 + $0x58] sm:$0xff]
    %v1136 = vld [vmem:[#allocation2 + $0x60] sm:$0xff]
    %v1137 = vld [vmem:[#allocation2 + $0x68] sm:$0xff]
    %v1138 = vld [vmem:[#allocation2 + $0x70] sm:$0xff]
    %v1139 = vld [vmem:[#allocation2 + $0x78] sm:$0xff]
    %v1140 = vld [vmem:[#allocation2 + $0x80] sm:$0xff]
    %v1141 = vld [vmem:[#allocation2 + $0x88] sm:$0xff]
    %v1142 = vld [vmem:[#allocation2 + $0x90] sm:$0xff]
    %v1143 = vld [vmem:[#allocation2 + $0x98] sm:$0xff]
    %v1144 = vld [vmem:[#allocation2 + $0xa0] sm:$0xff]
    %v1145 = vld [vmem:[#allocation2 + $0xa8] sm:$0xff]
    %v1146 = vld [vmem:[#allocation2 + $0xb0] sm:$0xff]
    %v1147 = vld [vmem:[#allocation2 + $0xb8] sm:$0xff]
    %v1148 = vld [vmem:[#allocation2 + $0xc0] sm:$0xff]
    %v1149 = vld [vmem:[#allocation2 + $0xc8] sm:$0xff]
    %v1150 = vld [vmem:[#allocation2 + $0xd0] sm:$0xff]
    %v1151 = vld [vmem:[#allocation2 + $0xd8] sm:$0xff]
    %v1152 = vld [vmem:[#allocation2 + $0xe0] sm:$0xff]
    %v1153 = vld [vmem:[#allocation2 + $0xe8] sm:$0xff]
    %v1154 = vld [vmem:[#allocation2 + $0xf0] sm:$0xff]
    %v1155 = vld [vmem:[#allocation2 + $0xf8] sm:$0xff]
    %v1156 = vld [vmem:[#allocation2 + $0x100] sm:$0xff]
    %v1157 = vld [vmem:[#allocation2 + $0x108] sm:$0xff]
    %v1158 = vld [vmem:[#allocation2 + $0x110] sm:$0xff]
    %v1159 = vld [vmem:[#allocation2 + $0x118] sm:$0xff]
    %v1160 = vld [vmem:[#allocation2 + $0x120] sm:$0xff]
    %v1161 = vld [vmem:[#allocation2 + $0x128] sm:$0xff]
    %v1162 = vld [vmem:[#allocation2 + $0x130] sm:$0xff]
    %v1163 = vld [vmem:[#allocation2 + $0x138] sm:$0xff]
    %v1164 = vld [vmem:[#allocation2 + $0x140] sm:$0xff]
    %v1165 = vld [vmem:[#allocation2 + $0x148] sm:$0xff]
    %v1166 = vld [vmem:[#allocation2 + $0x150] sm:$0xff]
    %v1167 = vld [vmem:[#allocation2 + $0x158] sm:$0xff]
    %v1168 = vld [vmem:[#allocation2 + $0x160] sm:$0xff]
    %v1169 = vld [vmem:[#allocation2 + $0x168] sm:$0xff]
    %v1170 = vld [vmem:[#allocation2 + $0x170] sm:$0xff]
    %v1171 = vld [vmem:[#allocation2 + $0x178] sm:$0xff]
    %v1173 = vlaneseq
    %v1174 = vshrl.u32 %v1173, 7
    %v1175 = vsub.s32 0, %v1174
    %v1176 = vrot.slane %v1120, %v1175
    %v1177 = vlaneseq
    %v1178 = vshrl.u32 %v1177, 7
    %v1179 = vsub.s32 1, %v1178
    %v1180 = vrot.slane %v1120, %v1179
    %v1231 = vunpack.c.l.b16 %v1124
    %v1232 = vunpack.c.h.b16 %v1124
    %v1233 = vunpack.c.l.b16 %v1125
    %v1234 = vunpack.c.h.b16 %v1125
    %v1235 = vunpack.c.l.b16 %v1126
    %v1236 = vunpack.c.h.b16 %v1126
    %v1237 = vunpack.c.l.b16 %v1127
    %v1238 = vunpack.c.h.b16 %v1127
    %v1239 = vunpack.c.l.b16 %v1128
    %v1240 = vunpack.c.h.b16 %v1128
    %v1241 = vunpack.c.l.b16 %v1129
    %v1242 = vunpack.c.h.b16 %v1129
    %v1243 = vunpack.c.l.b16 %v1130
    %v1244 = vunpack.c.h.b16 %v1130
    %v1245 = vunpack.c.l.b16 %v1131
    %v1246 = vunpack.c.h.b16 %v1131
    %v1247 = vunpack.c.l.b16 %v1132
    %v1248 = vunpack.c.h.b16 %v1132
    %v1249 = vunpack.c.l.b16 %v1133
    %v1250 = vunpack.c.h.b16 %v1133
    %v1251 = vunpack.c.l.b16 %v1134
    %v1252 = vunpack.c.h.b16 %v1134
    %v1253 = vunpack.c.l.b16 %v1135
    %v1254 = vunpack.c.h.b16 %v1135
    %v1255 = vunpack.c.l.b16 %v1136
    %v1256 = vunpack.c.h.b16 %v1136
    %v1257 = vunpack.c.l.b16 %v1137
    %v1258 = vunpack.c.h.b16 %v1137
    %v1259 = vunpack.c.l.b16 %v1138
    %v1260 = vunpack.c.h.b16 %v1138
    %v1261 = vunpack.c.l.b16 %v1139
    %v1262 = vunpack.c.h.b16 %v1139
    %v1263 = vunpack.c.l.b16 %v1140
    %v1264 = vunpack.c.h.b16 %v1140
    %v1265 = vunpack.c.l.b16 %v1141
    %v1266 = vunpack.c.h.b16 %v1141
    %v1267 = vunpack.c.l.b16 %v1142
    %v1268 = vunpack.c.h.b16 %v1142
    %v1269 = vunpack.c.l.b16 %v1143
    %v1270 = vunpack.c.h.b16 %v1143
    %v1271 = vunpack.c.l.b16 %v1144
    %v1272 = vunpack.c.h.b16 %v1144
    %v1273 = vunpack.c.l.b16 %v1145
    %v1274 = vunpack.c.h.b16 %v1145
    %v1275 = vunpack.c.l.b16 %v1146
    %v1276 = vunpack.c.h.b16 %v1146
    %v1277 = vunpack.c.l.b16 %v1147
    %v1278 = vunpack.c.h.b16 %v1147
    %v1279 = vunpack.c.l.b16 %v1148
    %v1280 = vunpack.c.h.b16 %v1148
    %v1281 = vunpack.c.l.b16 %v1149
    %v1282 = vunpack.c.h.b16 %v1149
    %v1283 = vunpack.c.l.b16 %v1150
    %v1284 = vunpack.c.h.b16 %v1150
    %v1285 = vunpack.c.l.b16 %v1151
    %v1286 = vunpack.c.h.b16 %v1151
    %v1287 = vunpack.c.l.b16 %v1152
    %v1288 = vunpack.c.h.b16 %v1152
    %v1289 = vunpack.c.l.b16 %v1153
    %v1290 = vunpack.c.h.b16 %v1153
    %v1291 = vunpack.c.l.b16 %v1154
    %v1292 = vunpack.c.h.b16 %v1154
    %v1293 = vunpack.c.l.b16 %v1155
    %v1294 = vunpack.c.h.b16 %v1155
    %v1295 = vunpack.c.l.b16 %v1156
    %v1296 = vunpack.c.h.b16 %v1156
    %v1297 = vunpack.c.l.b16 %v1157
    %v1298 = vunpack.c.h.b16 %v1157
    %v1299 = vunpack.c.l.b16 %v1158
    %v1300 = vunpack.c.h.b16 %v1158
    %v1301 = vunpack.c.l.b16 %v1159
    %v1302 = vunpack.c.h.b16 %v1159
    %v1303 = vunpack.c.l.b16 %v1160
    %v1304 = vunpack.c.h.b16 %v1160
    %v1305 = vunpack.c.l.b16 %v1161
    %v1306 = vunpack.c.h.b16 %v1161
    %v1307 = vunpack.c.l.b16 %v1162
    %v1308 = vunpack.c.h.b16 %v1162
    %v1309 = vunpack.c.l.b16 %v1163
    %v1310 = vunpack.c.h.b16 %v1163
    %v1311 = vunpack.c.l.b16 %v1164
    %v1312 = vunpack.c.h.b16 %v1164
    %v1313 = vunpack.c.l.b16 %v1165
    %v1314 = vunpack.c.h.b16 %v1165
    %v1315 = vunpack.c.l.b16 %v1166
    %v1316 = vunpack.c.h.b16 %v1166
    %v1317 = vunpack.c.l.b16 %v1167
    %v1318 = vunpack.c.h.b16 %v1167
    %v1319 = vunpack.c.l.b16 %v1168
    %v1320 = vunpack.c.h.b16 %v1168
    %v1321 = vunpack.c.l.b16 %v1169
    %v1322 = vunpack.c.h.b16 %v1169
    %v1323 = vunpack.c.l.b16 %v1170
    %v1324 = vunpack.c.h.b16 %v1170
    %v1325 = vunpack.c.l.b16 %v1171
    %v1326 = vunpack.c.h.b16 %v1171
    %v1327 = vpack.c.b16 %v1233, %v1231
    %v1328 = vpack.c.b16 %v1234, %v1232
    %v1329 = vpack.c.b16 %v1237, %v1235
    %v1330 = vpack.c.b16 %v1238, %v1236
    %v1331 = vpack.c.b16 %v1241, %v1239
    %v1332 = vpack.c.b16 %v1242, %v1240
    %v1333 = vpack.c.b16 %v1245, %v1243
    %v1334 = vpack.c.b16 %v1246, %v1244
    %v1335 = vpack.c.b16 %v1249, %v1247
    %v1336 = vpack.c.b16 %v1250, %v1248
    %v1337 = vpack.c.b16 %v1253, %v1251
    %v1338 = vpack.c.b16 %v1254, %v1252
    %v1339 = vpack.c.b16 %v1257, %v1255
    %v1340 = vpack.c.b16 %v1258, %v1256
    %v1341 = vpack.c.b16 %v1261, %v1259
    %v1342 = vpack.c.b16 %v1262, %v1260
    %v1343 = vpack.c.b16 %v1265, %v1263
    %v1344 = vpack.c.b16 %v1266, %v1264
    %v1345 = vpack.c.b16 %v1269, %v1267
    %v1346 = vpack.c.b16 %v1270, %v1268
    %v1347 = vpack.c.b16 %v1273, %v1271
    %v1348 = vpack.c.b16 %v1274, %v1272
    %v1349 = vpack.c.b16 %v1277, %v1275
    %v1350 = vpack.c.b16 %v1278, %v1276
    %v1351 = vpack.c.b16 %v1281, %v1279
    %v1352 = vpack.c.b16 %v1282, %v1280
    %v1353 = vpack.c.b16 %v1285, %v1283
    %v1354 = vpack.c.b16 %v1286, %v1284
    %v1355 = vpack.c.b16 %v1289, %v1287
    %v1356 = vpack.c.b16 %v1290, %v1288
    %v1357 = vpack.c.b16 %v1293, %v1291
    %v1358 = vpack.c.b16 %v1294, %v1292
    %v1359 = vpack.c.b16 %v1297, %v1295
    %v1360 = vpack.c.b16 %v1298, %v1296
    %v1361 = vpack.c.b16 %v1301, %v1299
    %v1362 = vpack.c.b16 %v1302, %v1300
    %v1363 = vpack.c.b16 %v1305, %v1303
    %v1364 = vpack.c.b16 %v1306, %v1304
    %v1365 = vpack.c.b16 %v1309, %v1307
    %v1366 = vpack.c.b16 %v1310, %v1308
    %v1367 = vpack.c.b16 %v1313, %v1311
    %v1368 = vpack.c.b16 %v1314, %v1312
    %v1369 = vpack.c.b16 %v1317, %v1315
    %v1370 = vpack.c.b16 %v1318, %v1316
    %v1371 = vpack.c.b16 %v1321, %v1319
    %v1372 = vpack.c.b16 %v1322, %v1320
    %v1373 = vpack.c.b16 %v1325, %v1323
    %v1374 = vpack.c.b16 %v1326, %v1324
    %1423 = vmatprep.subr.bf16.mxu0 %v1328
    %1424 = vmatpush1.bf16.msra.mxu0 %v1327
    %1425 = vmatprep.subr.bf16.mxu0 %v1330
    %1426 = vmatpush1.bf16.msra.mxu0 %v1329
    %1427 = vmatprep.subr.bf16.mxu0 %v1332
    %1428 = vmatpush1.bf16.msra.mxu0 %v1331
    %1429 = vmatprep.subr.bf16.mxu0 %v1334
    %1430 = vmatpush1.bf16.msra.mxu0 %v1333
    %1431 = vmatprep.subr.bf16.mxu0 %v1336
    %1432 = vmatpush1.bf16.msra.mxu0 %v1335
    %1433 = vmatprep.subr.bf16.mxu0 %v1338
    %1434 = vmatpush1.bf16.msra.mxu0 %v1337
    %1435 = vmatprep.subr.bf16.mxu0 %v1340
    %1436 = vmatpush1.bf16.msra.mxu0 %v1339
    %1437 = vmatprep.subr.bf16.mxu0 %v1342
    %1438 = vmatpush1.bf16.msra.mxu0 %v1341
    %1439 = vmatprep.subr.bf16.mxu0 %v1344
    %1440 = vmatpush1.bf16.msra.mxu0 %v1343
    %1441 = vmatprep.subr.bf16.mxu0 %v1346
    %1442 = vmatpush1.bf16.msra.mxu0 %v1345
    %1443 = vmatprep.subr.bf16.mxu0 %v1348
    %1444 = vmatpush1.bf16.msra.mxu0 %v1347
    %1445 = vmatprep.subr.bf16.mxu0 %v1350
    %1446 = vmatpush1.bf16.msra.mxu0 %v1349
    %1447 = vmatprep.subr.bf16.mxu0 %v1352
    %1448 = vmatpush1.bf16.msra.mxu0 %v1351
    %1449 = vmatprep.subr.bf16.mxu0 %v1354
    %1450 = vmatpush1.bf16.msra.mxu0 %v1353
    %1451 = vmatprep.subr.bf16.mxu0 %v1356
    %1452 = vmatpush1.bf16.msra.mxu0 %v1355
    %1453 = vmatprep.subr.bf16.mxu0 %v1358
    %1454 = vmatpush1.bf16.msra.mxu0 %v1357
    %1455 = vmatprep.mubr.bf16.mxu0 %v1122
    %1456 = vmatmul.mubr.bf16.gmra.mrb[0].mxu0 %v1121
    %v1457 = vpop.f32.mrb[0].mxu0
    %v1458 = vadd.f32 %v1176, %v1457
    %v1459 = vpop.f32.mrb[0].mxu0
    %v1460 = vadd.f32 %v1180, %v1459
    %v1461 = vpop.f32.mrb[0].mxu0
    %v1462 = vadd.f32 %v1176, %v1461
    %v1463 = vpop.f32.mrb[0].mxu0
    %v1464 = vadd.f32 %v1180, %v1463
    %1465 = vdwg.mxu0
    %1466 = vmatprep.subr.bf16.mxu0 %v1360
    %1467 = vmatpush1.bf16.msra.mxu0 %v1359
    %1468 = vmatprep.subr.bf16.mxu0 %v1362
    %1469 = vmatpush1.bf16.msra.mxu0 %v1361
    %1470 = vmatprep.subr.bf16.mxu0 %v1364
    %1471 = vmatpush1.bf16.msra.mxu0 %v1363
    %1472 = vmatprep.subr.bf16.mxu0 %v1366
    %1473 = vmatpush1.bf16.msra.mxu0 %v1365
    %1474 = vmatprep.subr.bf16.mxu0 %v1368
    %1475 = vmatpush1.bf16.msra.mxu0 %v1367
    %1476 = vmatprep.subr.bf16.mxu0 %v1370
    %1477 = vmatpush1.bf16.msra.mxu0 %v1369
    %1478 = vmatprep.subr.bf16.mxu0 %v1372
    %1479 = vmatpush1.bf16.msra.mxu0 %v1371
    %1480 = vmatprep.subr.bf16.mxu0 %v1374
    %1481 = vmatpush1.bf16.msra.mxu0 %v1373
    %1482 = vmatprep.subr.bf16.mxu0 0
    %1483 = vmatpush1.bf16.msra.mxu0 0
    %1484 = vmatprep.subr.bf16.mxu0 0
    %1485 = vmatpush1.bf16.msra.mxu0 0
    %1486 = vmatprep.subr.bf16.mxu0 0
    %1487 = vmatpush1.bf16.msra.mxu0 0
    %1488 = vmatprep.subr.bf16.mxu0 0
    %1489 = vmatpush1.bf16.msra.mxu0 0
    %1490 = vmatprep.subr.bf16.mxu0 0
    %1491 = vmatpush1.bf16.msra.mxu0 0
    %1492 = vmatprep.subr.bf16.mxu0 0
    %1493 = vmatpush1.bf16.msra.mxu0 0
    %1494 = vmatprep.subr.bf16.mxu0 0
    %1495 = vmatpush1.bf16.msra.mxu0 0
    %1496 = vmatprep.subr.bf16.mxu0 0
    %1497 = vmatpush1.bf16.msra.mxu0 0
    %1498 = vmatprep.mubr.bf16.mxu0 0
    %1499 = vmatmul.mubr.bf16.gmra.mrb[0].mxu0 %v1123
    %v1500 = vpop.f32.mrb[0].mxu0
    %v1501 = vadd.f32 %v1458, %v1500
    %v1502 = vpop.f32.mrb[0].mxu0
    %v1503 = vadd.f32 %v1460, %v1502
    %v1504 = vpop.f32.mrb[0].mxu0
    %v1505 = vadd.f32 %v1462, %v1504
    %v1506 = vpop.f32.mrb[0].mxu0
    %v1507 = vadd.f32 %v1464, %v1506
    %1508 = vdwg.mxu0
    %v1509 = vmax.f32 %v1501, 0.0
    %v1510 = vmax.f32 %v1503, 0.0
    %v1511 = vmax.f32 %v1505, 0.0
    %v1512 = vmax.f32 %v1507, 0.0
    %v1513 = vld [vmem:[%s7 + $0x2] ss:$0 sm:$0xff]
    %v1514 = vpack.c.bf16 %v1511, %v1509
    %v1515 = vpack.c.bf16 %v1512, %v1510
    %v1516 = vld [vmem:[%s5] sm:$0xf]
    %v1517 = vld [vmem:[%s5 + $0x4] sm:$0xf]
    %v1518 = vld [vmem:[%s5 + $0x8] sm:$0xf]
    %v1519 = vld [vmem:[%s5 + $0xc] sm:$0xf]
    %v1520 = vld [vmem:[%s5 + $0x10] sm:$0xf]
    %v1521 = vld [vmem:[%s5 + $0x14] sm:$0xf]
    %v1522 = vld [vmem:[%s5 + $0x18] sm:$0xf]
    %v1523 = vld [vmem:[%s5 + $0x1c] sm:$0xf]
    %v1524 = vld [vmem:[%s5 + $0x20] sm:$0xf]
    %v1525 = vld [vmem:[%s5 + $0x24] sm:$0xf]
    %v1526 = vld [vmem:[%s5 + $0x28] sm:$0xf]
    %v1527 = vld [vmem:[%s5 + $0x2c] sm:$0xf]
    %v1528 = vld [vmem:[%s5 + $0x30] sm:$0xf]
    %v1529 = vld [vmem:[%s5 + $0x34] sm:$0xf]
    %v1530 = vld [vmem:[%s5 + $0x38] sm:$0xf]
    %v1531 = vld [vmem:[%s5 + $0x3c] sm:$0xf]
    %v1532 = vld [vmem:[%s5 + $0x40] sm:$0xf]
    %v1533 = vld [vmem:[%s5 + $0x44] sm:$0xf]
    %v1534 = vld [vmem:[%s5 + $0x48] sm:$0xf]
    %v1535 = vld [vmem:[%s5 + $0x4c] sm:$0xf]
    %v1536 = vld [vmem:[%s5 + $0x50] sm:$0xf]
    %v1537 = vld [vmem:[%s5 + $0x54] sm:$0xf]
    %v1538 = vld [vmem:[%s5 + $0x58] sm:$0xf]
    %v1539 = vld [vmem:[%s5 + $0x5c] sm:$0xf]
    %v1540 = vld [vmem:[%s5 + $0x60] sm:$0xf]
    %v1541 = vld [vmem:[%s5 + $0x64] sm:$0xf]
    %v1542 = vld [vmem:[%s5 + $0x68] sm:$0xf]
    %v1543 = vld [vmem:[%s5 + $0x6c] sm:$0xf]
    %v1544 = vld [vmem:[%s5 + $0x70] sm:$0xf]
    %v1545 = vld [vmem:[%s5 + $0x74] sm:$0xf]
    %v1546 = vld [vmem:[%s5 + $0x78] sm:$0xf]
    %v1547 = vld [vmem:[%s5 + $0x7c] sm:$0xf]
    %v1580 = vunpack.c.l.b16 %v1516
    %v1581 = vunpack.c.l.b16 %v1517
    %v1582 = vunpack.c.l.b16 %v1518
    %v1583 = vunpack.c.l.b16 %v1519
    %v1584 = vunpack.c.l.b16 %v1520
    %v1585 = vunpack.c.l.b16 %v1521
    %v1586 = vunpack.c.l.b16 %v1522
    %v1587 = vunpack.c.l.b16 %v1523
    %v1588 = vunpack.c.l.b16 %v1524
    %v1589 = vunpack.c.l.b16 %v1525
    %v1590 = vunpack.c.l.b16 %v1526
    %v1591 = vunpack.c.l.b16 %v1527
    %v1592 = vunpack.c.l.b16 %v1528
    %v1593 = vunpack.c.l.b16 %v1529
    %v1594 = vunpack.c.l.b16 %v1530
    %v1595 = vunpack.c.l.b16 %v1531
    %v1596 = vunpack.c.l.b16 %v1532
    %v1597 = vunpack.c.l.b16 %v1533
    %v1598 = vunpack.c.l.b16 %v1534
    %v1599 = vunpack.c.l.b16 %v1535
    %v1600 = vunpack.c.l.b16 %v1536
    %v1601 = vunpack.c.l.b16 %v1537
    %v1602 = vunpack.c.l.b16 %v1538
    %v1603 = vunpack.c.l.b16 %v1539
    %v1604 = vunpack.c.l.b16 %v1540
    %v1605 = vunpack.c.l.b16 %v1541
    %v1606 = vunpack.c.l.b16 %v1542
    %v1607 = vunpack.c.l.b16 %v1543
    %v1608 = vunpack.c.l.b16 %v1544
    %v1609 = vunpack.c.l.b16 %v1545
    %v1610 = vunpack.c.l.b16 %v1546
    %v1611 = vunpack.c.l.b16 %v1547
    %v1612 = vpack.c.b16 %v1581, %v1580
    %v1613 = vpack.c.b16 %v1583, %v1582
    %v1614 = vpack.c.b16 %v1585, %v1584
    %v1615 = vpack.c.b16 %v1587, %v1586
    %v1616 = vpack.c.b16 %v1589, %v1588
    %v1617 = vpack.c.b16 %v1591, %v1590
    %v1618 = vpack.c.b16 %v1593, %v1592
    %v1619 = vpack.c.b16 %v1595, %v1594
    %v1620 = vpack.c.b16 %v1597, %v1596
    %v1621 = vpack.c.b16 %v1599, %v1598
    %v1622 = vpack.c.b16 %v1601, %v1600
    %v1623 = vpack.c.b16 %v1603, %v1602
    %v1624 = vpack.c.b16 %v1605, %v1604
    %v1625 = vpack.c.b16 %v1607, %v1606
    %v1626 = vpack.c.b16 %v1609, %v1608
    %v1627 = vpack.c.b16 %v1611, %v1610
    %1644 = vmatprep.subr.bf16.mxu0 0
    %1645 = vmatpush1.bf16.msra.mxu0 %v1612
    %1646 = vmatprep.subr.bf16.mxu0 0
    %1647 = vmatpush1.bf16.msra.mxu0 %v1613
    %1648 = vmatprep.subr.bf16.mxu0 0
    %1649 = vmatpush1.bf16.msra.mxu0 %v1614
    %1650 = vmatprep.subr.bf16.mxu0 0
    %1651 = vmatpush1.bf16.msra.mxu0 %v1615
    %1652 = vmatprep.subr.bf16.mxu0 0
    %1653 = vmatpush1.bf16.msra.mxu0 %v1616
    %1654 = vmatprep.subr.bf16.mxu0 0
    %1655 = vmatpush1.bf16.msra.mxu0 %v1617
    %1656 = vmatprep.subr.bf16.mxu0 0
    %1657 = vmatpush1.bf16.msra.mxu0 %v1618
    %1658 = vmatprep.subr.bf16.mxu0 0
    %1659 = vmatpush1.bf16.msra.mxu0 %v1619
    %1660 = vmatprep.subr.bf16.mxu0 0
    %1661 = vmatpush1.bf16.msra.mxu0 %v1620
    %1662 = vmatprep.subr.bf16.mxu0 0
    %1663 = vmatpush1.bf16.msra.mxu0 %v1621
    %1664 = vmatprep.subr.bf16.mxu0 0
    %1665 = vmatpush1.bf16.msra.mxu0 %v1622
    %1666 = vmatprep.subr.bf16.mxu0 0
    %1667 = vmatpush1.bf16.msra.mxu0 %v1623
    %1668 = vmatprep.subr.bf16.mxu0 0
    %1669 = vmatpush1.bf16.msra.mxu0 %v1624
    %1670 = vmatprep.subr.bf16.mxu0 0
    %1671 = vmatpush1.bf16.msra.mxu0 %v1625
    %1672 = vmatprep.subr.bf16.mxu0 0
    %1673 = vmatpush1.bf16.msra.mxu0 %v1626
    %1674 = vmatprep.subr.bf16.mxu0 0
    %1675 = vmatpush1.bf16.msra.mxu0 %v1627
    %1676 = vmatprep.mubr.bf16.mxu0 %v1515
    %1677 = vmatmul.mubr.bf16.gmra.mrb[0].mxu0 %v1514
    %v1678 = vpop.f32.mrb[0].mxu0
    %v1679 = vadd.f32 %v1513, %v1678
    %v1680 = vpop.f32.mrb[0].mxu0
    %v1681 = vpop.f32.mrb[0].mxu0
    %v1682 = vadd.f32 %v1513, %v1681
    %v1683 = vpop.f32.mrb[0].mxu0
    %1684 = vdwg.mxu0
    %v1685 = vmax.f32 %v1679, 0.0
    %v1686 = vmax.f32 %v1682, 0.0
    %v1687 = vld [vmem:[%s7 + $0x3] ss:$0 sm:$0xff]
    %v1688 = vpack.c.bf16 %v1686, %v1685
    %v1689 = vld [vmem:[%s6] sm:$0xf]
    %v1690 = vld [vmem:[%s6 + $0x4] sm:$0xf]
    %v1691 = vld [vmem:[%s6 + $0x8] sm:$0xf]
    %v1692 = vld [vmem:[%s6 + $0xc] sm:$0xf]
    %v1693 = vld [vmem:[%s6 + $0x10] sm:$0xf]
    %v1694 = vld [vmem:[%s6 + $0x14] sm:$0xf]
    %v1695 = vld [vmem:[%s6 + $0x18] sm:$0xf]
    %v1696 = vld [vmem:[%s6 + $0x1c] sm:$0xf]
    %v1697 = vld [vmem:[%s6 + $0x20] sm:$0xf]
    %v1698 = vld [vmem:[%s6 + $0x24] sm:$0xf]
    %v1699 = vld [vmem:[%s6 + $0x28] sm:$0xf]
    %v1700 = vld [vmem:[%s6 + $0x2c] sm:$0xf]
    %v1701 = vld [vmem:[%s6 + $0x30] sm:$0xf]
    %v1702 = vld [vmem:[%s6 + $0x34] sm:$0xf]
    %v1703 = vld [vmem:[%s6 + $0x38] sm:$0xf]
    %v1704 = vld [vmem:[%s6 + $0x3c] sm:$0xf]
    %v1721 = vunpack.c.l.b16 %v1689
    %v1722 = vunpack.c.l.b16 %v1690
    %v1723 = vunpack.c.l.b16 %v1691
    %v1724 = vunpack.c.l.b16 %v1692
    %v1725 = vunpack.c.l.b16 %v1693
    %v1726 = vunpack.c.l.b16 %v1694
    %v1727 = vunpack.c.l.b16 %v1695
    %v1728 = vunpack.c.l.b16 %v1696
    %v1729 = vunpack.c.l.b16 %v1697
    %v1730 = vunpack.c.l.b16 %v1698
    %v1731 = vunpack.c.l.b16 %v1699
    %v1732 = vunpack.c.l.b16 %v1700
    %v1733 = vunpack.c.l.b16 %v1701
    %v1734 = vunpack.c.l.b16 %v1702
    %v1735 = vunpack.c.l.b16 %v1703
    %v1736 = vunpack.c.l.b16 %v1704
    %v1737 = vpack.c.b16 %v1722, %v1721
    %v1738 = vpack.c.b16 %v1724, %v1723
    %v1739 = vpack.c.b16 %v1726, %v1725
    %v1740 = vpack.c.b16 %v1728, %v1727
    %v1741 = vpack.c.b16 %v1730, %v1729
    %v1742 = vpack.c.b16 %v1732, %v1731
    %v1743 = vpack.c.b16 %v1734, %v1733
    %v1744 = vpack.c.b16 %v1736, %v1735
    %1753 = vmatprep.subr.bf16.mxu0 0
    %1754 = vmatpush1.bf16.msra.mxu0 %v1737
    %1755 = vmatprep.subr.bf16.mxu0 0
    %1756 = vmatpush1.bf16.msra.mxu0 %v1738
    %1757 = vmatprep.subr.bf16.mxu0 0
    %1758 = vmatpush1.bf16.msra.mxu0 %v1739
    %1759 = vmatprep.subr.bf16.mxu0 0
    %1760 = vmatpush1.bf16.msra.mxu0 %v1740
    %1761 = vmatprep.subr.bf16.mxu0 0
    %1762 = vmatpush1.bf16.msra.mxu0 %v1741
    %1763 = vmatprep.subr.bf16.mxu0 0
    %1764 = vmatpush1.bf16.msra.mxu0 %v1742
    %1765 = vmatprep.subr.bf16.mxu0 0
    %1766 = vmatpush1.bf16.msra.mxu0 %v1743
    %1767 = vmatprep.subr.bf16.mxu0 0
    %1768 = vmatpush1.bf16.msra.mxu0 %v1744
    %1769 = vmatprep.subr.bf16.mxu0 0
    %1770 = vmatpush1.bf16.msra.mxu0 0
    %1771 = vmatprep.subr.bf16.mxu0 0
    %1772 = vmatpush1.bf16.msra.mxu0 0
    %1773 = vmatprep.subr.bf16.mxu0 0
    %1774 = vmatpush1.bf16.msra.mxu0 0
    %1775 = vmatprep.subr.bf16.mxu0 0
    %1776 = vmatpush1.bf16.msra.mxu0 0
    %1777 = vmatprep.subr.bf16.mxu0 0
    %1778 = vmatpush1.bf16.msra.mxu0 0
    %1779 = vmatprep.subr.bf16.mxu0 0
    %1780 = vmatpush1.bf16.msra.mxu0 0
    %1781 = vmatprep.subr.bf16.mxu0 0
    %1782 = vmatpush1.bf16.msra.mxu0 0
    %1783 = vmatprep.subr.bf16.mxu0 0
    %1784 = vmatpush1.bf16.msra.mxu0 0
    %1785 = vmatprep.mubr.bf16.mxu0 0
    %1786 = vmatmul.mubr.bf16.gmra.mrb[0].mxu0 %v1688
    %v1787 = vpop.f32.mrb[0].mxu0
    %v1788 = vadd.f32 %v1687, %v1787
    %v1789 = vpop.f32.mrb[0].mxu0
    %v1790 = vpop.f32.mrb[0].mxu0
    %v1791 = vadd.f32 %v1687, %v1790
    %v1792 = vpop.f32.mrb[0].mxu0
    %1793 = vdwg.mxu0
    %v1794 = vmax.f32 %v1788, 0.0
    %v1795 = vmax.f32 %v1791, 0.0
    %v1796 = vld [vmem:[%s7 + $0x4] ss:$0 sm:$0xff]
    %v1797 = vld [vmem:[%s7 + $0x5] ss:$0 sm:$0xff]
    %v1798 = vmul.f32 %v1794, %v1796
    %v1799 = vmul.f32 %v1795, %v1796
    %1800 = vadd.xlane.f32.xlu0 %v1798
    %v1801 = vpop.xlane.xlu0 %1800
    %1802 = vadd.xlane.f32.xlu0 %v1799
    %v1803 = vpop.xlane.xlu0 %1802
    %v1804 = vadd.f32 %v1801, %v1797
    %v1805 = vadd.f32 %v1803, %v1797
    %vm1806 = vcmask 7168
    %1807 = vst.msk [vmem:[%s8] sm:$0xff] %vm1806, %v1804
    %1808 = vst.msk [vmem:[%s8 + $0x8] sm:$0xff] %vm1806, %v1805
    // Predicated region
    $region38: #{agnostic_q_forward_batch.1} parent=1 // pred_check
      _
    $region39: #{agnostic_q_forward_batch.1} parent=1 // pred_check_branch
      %1810 = sbr.rel (0) target = $region41
    $region40: #{agnostic_q_forward_batch.1} parent=1 // pred_region
      _
    $region41: #{agnostic_q_forward_batch.1} parent=1 // pred_fallthru
      _
    // Predicated region
    $region42: #{agnostic_q_forward_batch.1} parent=1 // pred_check
      _
    $region43: #{agnostic_q_forward_batch.1} parent=1 // pred_check_branch
      %1812 = sbr.rel (0) target = $region45
    $region44: #{agnostic_q_forward_batch.1} parent=1 // pred_region
      _
    $region45: #{agnostic_q_forward_batch.1} parent=1 // pred_fallthru
      _
    %1813 = vsyncpa [#allocation3], 1

</llo_original>
